<compile_context>
chip_gen: v5e
topology: v5e:2x2
jax: 0.10.0
libtpu: 0.0.40
codegen_flags: <defaults>
</compile_context>

<pallas_src>
import functools

import jax
import jax.numpy as jnp
from jax import lax
from jax.experimental import pallas as pl
from jax.experimental.pallas import tpu as pltpu

BN_EPS = 1e-5
LANES = 128
_MIB = 1 << 20


def _round_up(x, m):
    return (x + m - 1) // m * m


def _pack_size(dtype):
    # Sublane pack size: 8 for f32, 16 for bf16, 32 for int8/fp8.
    return (4 // jnp.dtype(dtype).itemsize) * 8


def _vmem_bytes(th, Wp, c_in_pad, c_out_pad, c_out, mxu_bytes, out_bytes, store_y):
    """Rough per-grid-step VMEM estimate (double-buffered blocks + temporaries)."""
    L = th * Wp
    Lwin = (th + 2) * Wp + 2
    k9 = 9 * c_in_pad
    b = 2 * Lwin * c_in_pad * mxu_bytes          # x tile block
    b += 2 * k9 * c_out_pad * mxu_bytes          # folded weights
    b += 2 * L * 4                               # column-validity mask
    b += 2 * 2 * c_out_pad * 4                   # per-tile stats block
    b += 2 * L * c_out * max(out_bytes, mxu_bytes)   # out / y block
    if store_y:
        b += 2 * L * c_out * mxu_bytes           # y block in the other pass
    # In-kernel temporaries: folded LHS, f32 matmul result, relayout slack.
    b += 2 * L * k9 * mxu_bytes
    b += 2 * L * c_out_pad * 4
    return b


def _choose_tile_h(H, Wp, max_rows, budget_bytes, est):
    """Largest divisor of H (<= max_rows) fitting the VMEM budget, preferring
    tiles whose flattened spatial length is sublane (8) aligned."""
    divisors = [d for d in range(1, H + 1) if H % d == 0 and d <= max(max_rows, 1)]
    fitting = [d for d in divisors if est(d) <= budget_bytes]
    if not fitting:
        return 1
    aligned = [d for d in fitting if (d * Wp) % 8 == 0]
    return max(aligned) if aligned else max(fitting)


def _make_kernels(*, th, Wp, c_out):
    L = th * Wp

    def conv_tile(x_ref, w_ref):
        # 3x3 conv for `th` output rows as ONE MXU matmul: the 9 tap-shifted
        # (L, Cin_pad) views (static offsets kh*Wp + kw) are concatenated along
        # the contraction/lane axis (K = 9*Cin_pad), matching the tap-major
        # folded weights.  Columns W..Wp-1 of each output row are junk (width
        # wrap-around) and are masked / sliced off by the callers.
        views = [x_ref[0, pl.ds(kh * Wp + kw, L), :]
                 for kh in range(3) for kw in range(3)]
        lhs = jnp.concatenate(views, axis=-1)               # (L, 9*Cin_pad)
        return jnp.dot(lhs, w_ref[...], preferred_element_type=jnp.float32)

    def _stats(y, mask):
        ym = y * mask                                        # zero wrap cols
        return jnp.concatenate(
            [jnp.sum(ym, axis=0, keepdims=True),
             jnp.sum(ym * y, axis=0, keepdims=True)], axis=0)   # (2, Cout_pad)

    def stats_kernel(x_ref, w_ref, mask_ref, psum_ref):
        y = conv_tile(x_ref, w_ref)
        psum_ref[0, :, :] = _stats(y, mask_ref[...])

    def stats_store_kernel(x_ref, w_ref, mask_ref, psum_ref, y_ref):
        y = conv_tile(x_ref, w_ref)
        y_ref[0, :, :] = y[:, :c_out].astype(y_ref.dtype)    # C_out lanes only
        psum_ref[0, :, :] = _stats(y, mask_ref[...])

    def conv_bn_relu_kernel(x_ref, w_ref, ac_ref, out_ref):
        y = conv_tile(x_ref, w_ref)[:, :c_out]
        a = ac_ref[0:1, :]            # gamma * rsqrt(var + eps)
        c = ac_ref[1:2, :]            # beta - mean * a
        out_ref[0, :, :] = jnp.maximum(y * a + c, 0.0).astype(out_ref.dtype)

    def bn_relu_kernel(y_ref, ac_ref, out_ref):
        y = y_ref[0, :, :].astype(jnp.float32)
        a = ac_ref[0:1, :]
        c = ac_ref[1:2, :]
        out_ref[0, :, :] = jnp.maximum(y * a + c, 0.0).astype(out_ref.dtype)

    return stats_kernel, stats_store_kernel, conv_bn_relu_kernel, bn_relu_kernel


@functools.partial(
    jax.jit, static_argnames=("tile_h", "mxu_dtype", "out_dtype", "store_conv"))
def conv_block_forward(x_nchw, weight, bias, gamma, beta, *,
                       tile_h=64, mxu_dtype=jnp.bfloat16, out_dtype=None,
                       store_conv=None):
    """ConvBlock forward (norm='batch', training-mode statistics).

    x_nchw: (N, C_in, H, W); weight: (C_out, C_in, 3, 3); gamma/beta: (C_out,).
    `bias` is accepted for interface parity but unused (cancels under
    training-mode BN).  Returns (N, C_out, H, W) in `out_dtype` (default:
    the caller's activation dtype).
    """
    del bias
    N, C_in, H, W = x_nchw.shape
    C_out = weight.shape[0]
    Hp, Wp = H + 2, W + 2

    out_dtype = jnp.dtype(x_nchw.dtype) if out_dtype is None else jnp.dtype(out_dtype)
    mxu_bytes = jnp.dtype(mxu_dtype).itemsize
    out_bytes = out_dtype.itemsize

    c_in_pad = _round_up(C_in, _pack_size(mxu_dtype))
    c_out_pad = _round_up(C_out, LANES)   # MXU N-width & stats lanes only
    k9 = 9 * c_in_pad

    if store_conv is None:
        # Recompute the conv in pass 2 when K is small (extra MXU work and
        # x re-read are cheaper than writing + re-reading y).
        store_conv = (9 * C_in) >= 128

    budget = 24 * _MIB
    est = lambda d: _vmem_bytes(d, Wp, c_in_pad, c_out_pad, C_out,
                                mxu_bytes, out_bytes, store_conv)
    th = _choose_tile_h(H, Wp, tile_h, budget, est)
    HB = H // th
    T = N * HB
    L = th * Wp
    Lwin = (th + 2) * Wp + 2            # +2 spare so the kw shifts stay in bounds
    vmem_limit = int(max(32 * _MIB, min(2 * est(th), 48 * _MIB)))

    # ---- glue: NCHW -> padded NHWC -> halo-duplicated flattened tiles ----
    # Each grid step stages only its (th+2)-row halo window, so per-step VMEM
    # is independent of the full image size.
    x = jnp.transpose(x_nchw, (0, 2, 3, 1))                        # (N,H,W,Cin)
    x = jnp.pad(x, ((0, 0), (1, 1), (1, 1), (0, c_in_pad - C_in)))
    x = x.astype(mxu_dtype).reshape(N, Hp * Wp, c_in_pad)
    x = jnp.pad(x, ((0, 0), (0, 8), (0, 0)))                       # tail slack
    win_idx = (jnp.arange(HB) * (th * Wp))[:, None] + jnp.arange(Lwin)[None, :]
    x_tiles = jnp.take(x, win_idx, axis=1).reshape(T, Lwin, c_in_pad)

    # (C_out, C_in, 3, 3) -> (9*Cin_pad, Cout_pad), tap-major rows (kh*3 + kw).
    w = jnp.transpose(weight, (2, 3, 1, 0))                        # (3,3,Cin,Cout)
    w = jnp.pad(w, ((0, 0), (0, 0), (0, c_in_pad - C_in), (0, c_out_pad - C_out)))
    w = w.reshape(k9, c_out_pad).astype(mxu_dtype)

    # Per-position validity mask (1 for the W real columns, 0 for 2 wrap cols).
    mask = ((jnp.arange(L) % Wp) < W).astype(jnp.float32).reshape(L, 1)

    stats_k, stats_store_k, conv_bn_relu_k, bn_relu_k = _make_kernels(
        th=th, Wp=Wp, c_out=C_out)

    x_spec = pl.BlockSpec((1, Lwin, c_in_pad), lambda t: (t, 0, 0))
    w_spec = pl.BlockSpec((k9, c_out_pad), lambda t: (0, 0))
    mask_spec = pl.BlockSpec((L, 1), lambda t: (0, 0))
    psum_spec = pl.BlockSpec((1, 2, c_out_pad), lambda t: (t, 0, 0))
    y_spec = pl.BlockSpec((1, L, C_out), lambda t: (t, 0, 0))
    ac_spec = pl.BlockSpec((2, C_out), lambda t: (0, 0))

    params = pltpu.CompilerParams(dimension_semantics=("parallel",),
                                  vmem_limit_bytes=vmem_limit)

    psum_shape = jax.ShapeDtypeStruct((T, 2, c_out_pad), jnp.float32)
    out_shape = jax.ShapeDtypeStruct((T, L, C_out), out_dtype)

    # ---- pass 1: conv -> per-tile partial stats (and optionally y) ----
    if store_conv:
        psums, y_store = pl.pallas_call(
            stats_store_k,
            out_shape=(psum_shape, jax.ShapeDtypeStruct((T, L, C_out), mxu_dtype)),
            grid=(T,),
            in_specs=[x_spec, w_spec, mask_spec],
            out_specs=(psum_spec, y_spec),
            compiler_params=params,
        )(x_tiles, w, mask)
    else:
        psums = pl.pallas_call(
            stats_k,
            out_shape=psum_shape,
            grid=(T,),
            in_specs=[x_spec, w_spec, mask_spec],
            out_specs=psum_spec,
            compiler_params=params,
        )(x_tiles, w, mask)

    # ---- glue: combine partials -> fused per-channel scale / shift (f32) ----
    count = jnp.float32(N * H * W)
    s1 = jnp.sum(psums[:, 0, :C_out], axis=0)
    s2 = jnp.sum(psums[:, 1, :C_out], axis=0)
    mean = s1 / count
    var = jnp.maximum(s2 / count - mean * mean, 0.0)
    a = gamma.astype(jnp.float32) * lax.rsqrt(var + BN_EPS)
    c = beta.astype(jnp.float32) - mean * a
    ac = jnp.stack([a, c], axis=0)                                  # (2, C_out)

    # ---- pass 2: BN + ReLU (elementwise on stored y, or fused conv redo) ----
    if store_conv:
        out_t = pl.pallas_call(
            bn_relu_k,
            out_shape=out_shape,
            grid=(T,),
            in_specs=[y_spec, ac_spec],
            out_specs=y_spec,
            compiler_params=params,
        )(y_store, ac)
    else:
        out_t = pl.pallas_call(
            conv_bn_relu_k,
            out_shape=out_shape,
            grid=(T,),
            in_specs=[x_spec, w_spec, ac_spec],
            out_specs=y_spec,
            compiler_params=params,
        )(x_tiles, w, ac)

    # ---- glue: strip wrap columns, back to NCHW ----
    out = out_t.reshape(N, HB, th, Wp, C_out)[:, :, :, :W, :]
    out = out.reshape(N, H, W, C_out)
    return jnp.transpose(out, (0, 3, 1, 2))


def reference_forward(x_nchw, weight, bias, gamma, beta):
    """Pure-JAX reference (lax conv + training-mode batch norm + relu)."""
    y = jax.lax.conv_general_dilated(
        x_nchw, weight, window_strides=(1, 1), padding=((1, 1), (1, 1)),
        dimension_numbers=("NCHW", "OIHW", "NCHW"),
        precision=lax.Precision.HIGHEST)
    y = y + bias[None, :, None, None]
    mean = jnp.mean(y, axis=(0, 2, 3), keepdims=True)
    var = jnp.mean((y - mean) ** 2, axis=(0, 2, 3), keepdims=True)
    y = (y - mean) * jax.lax.rsqrt(var + BN_EPS)
    y = y * gamma[None, :, None, None] + beta[None, :, None, None]
    return jnp.maximum(y, 0.0)


if __name__ == "__main__":
    def make_inputs(key, N, C_in, C_out, H, W):
        kx, kwt, kb = jax.random.split(key, 3)
        x = jax.random.normal(kx, (N, C_in, H, W), dtype=jnp.float32)
        fan_in = C_in * 9
        bound = 1.0 / (fan_in ** 0.5)
        weight = jax.random.uniform(kwt, (C_out, C_in, 3, 3), jnp.float32,
                                    -bound, bound)
        bias = jax.random.uniform(kb, (C_out,), jnp.float32, -bound, bound)
        gamma = jnp.ones((C_out,), jnp.float32)
        beta = jnp.zeros((C_out,), jnp.float32)
        return x, weight, bias, gamma, beta

    k1, k2 = jax.random.split(jax.random.PRNGKey(0))

    # Case 1: small channels (auto -> recompute path, 9*C_in < 128).
    args1 = make_inputs(k1, 2, 4, 8, 16, 16)
    ref1 = reference_forward(*args1)

    o = jax.block_until_ready(conv_block_forward(
        *args1, tile_h=8, mxu_dtype=jnp.float32, out_dtype=jnp.float32))
    assert o.shape == ref1.shape and o.dtype == jnp.dtype(jnp.float32)
    assert jnp.allclose(o, ref1, atol=3e-2, rtol=3e-2), "case1 f32 mismatch"

    o = jax.block_until_ready(conv_block_forward(
        *args1, tile_h=8, mxu_dtype=jnp.bfloat16, out_dtype=jnp.bfloat16))
    assert o.shape == ref1.shape and o.dtype == jnp.dtype(jnp.bfloat16)
    assert jnp.allclose(o.astype(jnp.float32), ref1, atol=8e-2, rtol=8e-2), \
        "case1 bf16 mismatch"

    # Case 2: wider channels (auto -> store-y path, 9*C_in >= 128).
    args2 = make_inputs(k2, 2, 16, 32, 16, 16)
    ref2 = reference_forward(*args2)

    o = jax.block_until_ready(conv_block_forward(
        *args2, mxu_dtype=jnp.float32, out_dtype=jnp.float32))
    assert o.shape == ref2.shape
    assert jnp.allclose(o, ref2, atol=3e-2, rtol=3e-2), "case2 f32 mismatch"

    o = jax.block_until_ready(conv_block_forward(*args2, mxu_dtype=jnp.bfloat16))
    assert o.shape == ref2.shape and o.dtype == jnp.dtype(jnp.float32)
    assert jnp.allclose(o, ref2, atol=8e-2, rtol=8e-2), "case2 bf16 mismatch"

    print("KERNEL_OK")
</pallas_src>

<mosaic_0001>
module attributes {stable_mosaic.version = 11 : i64} {
  func.func @stats_kernel(%arg0: i32, %arg1: memref<1x182x8xf32, #tpu.memory_space<vmem>>, %arg2: memref<72x128xf32, #tpu.memory_space<vmem>>, %arg3: memref<144x1xf32, #tpu.memory_space<vmem>>, %arg4: memref<1x2x128xf32, #tpu.memory_space<vmem>>) attributes {dimension_semantics = [#tpu.dimension_semantics<parallel>], iteration_bounds = array<i64: 4>, scalar_prefetch = 0 : i64, scratch_operands = 0 : i64, tpu.core_type = #tpu.core_type<tc>, window_params = [{transform_indices = @transform_0, window_bounds = array<i64: 1, 182, 8>}, {pipeline_mode = #tpu.pipeline_mode<synchronous>, transform_indices = @transform_1, window_bounds = array<i64: 72, 128>}, {pipeline_mode = #tpu.pipeline_mode<synchronous>, transform_indices = @transform_2, window_bounds = array<i64: 144, 1>}, {transform_indices = @transform_3, window_bounds = array<i64: 1, 2, 128>}]} {
    %c0 = arith.constant 0 : index
    %c0_0 = arith.constant 0 : index
    %c0_1 = arith.constant 0 : index
    %0 = vector.load %arg1[%c0, %c0_0, %c0_1] : memref<1x182x8xf32, #tpu.memory_space<vmem>>, vector<1x144x8xf32>
    %1 = vector.shape_cast %0 : vector<1x144x8xf32> to vector<144x8xf32>
    %c0_2 = arith.constant 0 : index
    %c1 = arith.constant 1 : index
    %c0_3 = arith.constant 0 : index
    %2 = vector.load %arg1[%c0_2, %c1, %c0_3] : memref<1x182x8xf32, #tpu.memory_space<vmem>>, vector<1x144x8xf32>
    %3 = vector.shape_cast %2 : vector<1x144x8xf32> to vector<144x8xf32>
    %c0_4 = arith.constant 0 : index
    %c2 = arith.constant 2 : index
    %c0_5 = arith.constant 0 : index
    %4 = vector.load %arg1[%c0_4, %c2, %c0_5] : memref<1x182x8xf32, #tpu.memory_space<vmem>>, vector<1x144x8xf32>
    %5 = vector.shape_cast %4 : vector<1x144x8xf32> to vector<144x8xf32>
    %c0_6 = arith.constant 0 : index
    %c18 = arith.constant 18 : index
    %c0_7 = arith.constant 0 : index
    %6 = vector.load %arg1[%c0_6, %c18, %c0_7] : memref<1x182x8xf32, #tpu.memory_space<vmem>>, vector<1x144x8xf32>
    %7 = vector.shape_cast %6 : vector<1x144x8xf32> to vector<144x8xf32>
    %c0_8 = arith.constant 0 : index
    %c19 = arith.constant 19 : index
    %c0_9 = arith.constant 0 : index
    %8 = vector.load %arg1[%c0_8, %c19, %c0_9] : memref<1x182x8xf32, #tpu.memory_space<vmem>>, vector<1x144x8xf32>
    %9 = vector.shape_cast %8 : vector<1x144x8xf32> to vector<144x8xf32>
    %c0_10 = arith.constant 0 : index
    %c20 = arith.constant 20 : index
    %c0_11 = arith.constant 0 : index
    %10 = vector.load %arg1[%c0_10, %c20, %c0_11] : memref<1x182x8xf32, #tpu.memory_space<vmem>>, vector<1x144x8xf32>
    %11 = vector.shape_cast %10 : vector<1x144x8xf32> to vector<144x8xf32>
    %c0_12 = arith.constant 0 : index
    %c36 = arith.constant 36 : index
    %c0_13 = arith.constant 0 : index
    %12 = vector.load %arg1[%c0_12, %c36, %c0_13] : memref<1x182x8xf32, #tpu.memory_space<vmem>>, vector<1x144x8xf32>
    %13 = vector.shape_cast %12 : vector<1x144x8xf32> to vector<144x8xf32>
    %c0_14 = arith.constant 0 : index
    %c37 = arith.constant 37 : index
    %c0_15 = arith.constant 0 : index
    %14 = vector.load %arg1[%c0_14, %c37, %c0_15] : memref<1x182x8xf32, #tpu.memory_space<vmem>>, vector<1x144x8xf32>
    %15 = vector.shape_cast %14 : vector<1x144x8xf32> to vector<144x8xf32>
    %c0_16 = arith.constant 0 : index
    %c38 = arith.constant 38 : index
    %c0_17 = arith.constant 0 : index
    %16 = vector.load %arg1[%c0_16, %c38, %c0_17] : memref<1x182x8xf32, #tpu.memory_space<vmem>>, vector<1x144x8xf32>
    %17 = vector.shape_cast %16 : vector<1x144x8xf32> to vector<144x8xf32>
    %18 = tpu.concatenate %1, %3, %5, %7, %9, %11, %13, %15, %17 in 1 : vector<144x8xf32>, vector<144x8xf32>, vector<144x8xf32>, vector<144x8xf32>, vector<144x8xf32>, vector<144x8xf32>, vector<144x8xf32>, vector<144x8xf32>, vector<144x8xf32> -> vector<144x72xf32>
    %c0_18 = arith.constant 0 : index
    %c0_19 = arith.constant 0 : index
    %19 = vector.load %arg2[%c0_18, %c0_19] : memref<72x128xf32, #tpu.memory_space<vmem>>, vector<72x128xf32>
    %cst = arith.constant dense<0.000000e+00> : vector<144x128xf32>
    %20 = tpu.matmul %18, %19, %cst {dimension_numbers = #tpu.dot_dimension_numbers<[1], [0], [0], [1], [0, 0, 1, 1], [], []>} : vector<144x72xf32>, vector<72x128xf32>, vector<144x128xf32> -> vector<144x128xf32>
    %c0_20 = arith.constant 0 : index
    %c0_21 = arith.constant 0 : index
    %21 = vector.load %arg3[%c0_20, %c0_21] : memref<144x1xf32, #tpu.memory_space<vmem>>, vector<144x1xf32>
    %22 = vector.broadcast %21 : vector<144x1xf32> to vector<144x128xf32>
    %23 = arith.mulf %20, %22 : vector<144x128xf32>
    %cst_22 = arith.constant dense<0.000000e+00> : vector<128xf32>
    %24 = vector.multi_reduction <add>, %23, %cst_22 [0] : vector<144x128xf32> to vector<128xf32>
    %25 = vector.shape_cast %24 : vector<128xf32> to vector<1x128xf32>
    %26 = arith.mulf %23, %20 : vector<144x128xf32>
    %cst_23 = arith.constant dense<0.000000e+00> : vector<128xf32>
    %27 = vector.multi_reduction <add>, %26, %cst_23 [0] : vector<144x128xf32> to vector<128xf32>
    %28 = vector.shape_cast %27 : vector<128xf32> to vector<1x128xf32>
    %29 = tpu.concatenate %25, %28 in 0 : vector<1x128xf32>, vector<1x128xf32> -> vector<2x128xf32>
    %c0_24 = arith.constant 0 : index
    %c0_25 = arith.constant 0 : index
    %c0_26 = arith.constant 0 : index
    %30 = vector.load %arg4[%c0_24, %c0_25, %c0_26] : memref<1x2x128xf32, #tpu.memory_space<vmem>>, vector<1x2x128xf32>
    %31 = vector.shape_cast %30 : vector<1x2x128xf32> to vector<2x128xf32>
    %32 = vector.shape_cast %29 : vector<2x128xf32> to vector<1x2x128xf32>
    tpu.vector_store %arg4[%c0_24, %c0_25, %c0_26], %32 {strides = array<i32>} : memref<1x2x128xf32, #tpu.memory_space<vmem>>, vector<1x2x128xf32>,
    return
  }
  func.func @transform_0(%arg0: i32) -> (i32, i32, i32) {
    %c0_i32 = arith.constant 0 : i32
    %c0_i32_0 = arith.constant 0 : i32
    %c0_i32_1 = arith.constant 0 : i32
    return %arg0, %c0_i32, %c0_i32_0 : i32, i32, i32
  }
  func.func @transform_1(%arg0: i32) -> (i32, i32) {
    %c0_i32 = arith.constant 0 : i32
    %c0_i32_0 = arith.constant 0 : i32
    %c0_i32_1 = arith.constant 0 : i32
    return %c0_i32, %c0_i32_0 : i32, i32
  }
  func.func @transform_2(%arg0: i32) -> (i32, i32) {
    %c0_i32 = arith.constant 0 : i32
    %c0_i32_0 = arith.constant 0 : i32
    %c0_i32_1 = arith.constant 0 : i32
    return %c0_i32, %c0_i32_0 : i32, i32
  }
  func.func @transform_3(%arg0: i32) -> (i32, i32, i32) {
    %c0_i32 = arith.constant 0 : i32
    %c0_i32_0 = arith.constant 0 : i32
    %c0_i32_1 = arith.constant 0 : i32
    return %arg0, %c0_i32, %c0_i32_0 : i32, i32, i32
  }
}

module attributes {stable_mosaic.version = 11 : i64} {
  func.func @conv_bn_relu_kernel(%arg0: i32, %arg1: memref<1x182x8xf32, #tpu.memory_space<vmem>>, %arg2: memref<72x128xf32, #tpu.memory_space<vmem>>, %arg3: memref<2x8xf32, #tpu.memory_space<vmem>>, %arg4: memref<1x144x8xf32, #tpu.memory_space<vmem>>) attributes {dimension_semantics = [#tpu.dimension_semantics<parallel>], iteration_bounds = array<i64: 4>, scalar_prefetch = 0 : i64, scratch_operands = 0 : i64, tpu.core_type = #tpu.core_type<tc>, window_params = [{transform_indices = @transform_0, window_bounds = array<i64: 1, 182, 8>}, {pipeline_mode = #tpu.pipeline_mode<synchronous>, transform_indices = @transform_1, window_bounds = array<i64: 72, 128>}, {pipeline_mode = #tpu.pipeline_mode<synchronous>, transform_indices = @transform_2, window_bounds = array<i64: 2, 8>}, {transform_indices = @transform_3, window_bounds = array<i64: 1, 144, 8>}]} {
    %c0 = arith.constant 0 : index
    %c0_0 = arith.constant 0 : index
    %c0_1 = arith.constant 0 : index
    %0 = vector.load %arg1[%c0, %c0_0, %c0_1] : memref<1x182x8xf32, #tpu.memory_space<vmem>>, vector<1x144x8xf32>
    %1 = vector.shape_cast %0 : vector<1x144x8xf32> to vector<144x8xf32>
    %c0_2 = arith.constant 0 : index
    %c1 = arith.constant 1 : index
    %c0_3 = arith.constant 0 : index
    %2 = vector.load %arg1[%c0_2, %c1, %c0_3] : memref<1x182x8xf32, #tpu.memory_space<vmem>>, vector<1x144x8xf32>
    %3 = vector.shape_cast %2 : vector<1x144x8xf32> to vector<144x8xf32>
    %c0_4 = arith.constant 0 : index
    %c2 = arith.constant 2 : index
    %c0_5 = arith.constant 0 : index
    %4 = vector.load %arg1[%c0_4, %c2, %c0_5] : memref<1x182x8xf32, #tpu.memory_space<vmem>>, vector<1x144x8xf32>
    %5 = vector.shape_cast %4 : vector<1x144x8xf32> to vector<144x8xf32>
    %c0_6 = arith.constant 0 : index
    %c18 = arith.constant 18 : index
    %c0_7 = arith.constant 0 : index
    %6 = vector.load %arg1[%c0_6, %c18, %c0_7] : memref<1x182x8xf32, #tpu.memory_space<vmem>>, vector<1x144x8xf32>
    %7 = vector.shape_cast %6 : vector<1x144x8xf32> to vector<144x8xf32>
    %c0_8 = arith.constant 0 : index
    %c19 = arith.constant 19 : index
    %c0_9 = arith.constant 0 : index
    %8 = vector.load %arg1[%c0_8, %c19, %c0_9] : memref<1x182x8xf32, #tpu.memory_space<vmem>>, vector<1x144x8xf32>
    %9 = vector.shape_cast %8 : vector<1x144x8xf32> to vector<144x8xf32>
    %c0_10 = arith.constant 0 : index
    %c20 = arith.constant 20 : index
    %c0_11 = arith.constant 0 : index
    %10 = vector.load %arg1[%c0_10, %c20, %c0_11] : memref<1x182x8xf32, #tpu.memory_space<vmem>>, vector<1x144x8xf32>
    %11 = vector.shape_cast %10 : vector<1x144x8xf32> to vector<144x8xf32>
    %c0_12 = arith.constant 0 : index
    %c36 = arith.constant 36 : index
    %c0_13 = arith.constant 0 : index
    %12 = vector.load %arg1[%c0_12, %c36, %c0_13] : memref<1x182x8xf32, #tpu.memory_space<vmem>>, vector<1x144x8xf32>
    %13 = vector.shape_cast %12 : vector<1x144x8xf32> to vector<144x8xf32>
    %c0_14 = arith.constant 0 : index
    %c37 = arith.constant 37 : index
    %c0_15 = arith.constant 0 : index
    %14 = vector.load %arg1[%c0_14, %c37, %c0_15] : memref<1x182x8xf32, #tpu.memory_space<vmem>>, vector<1x144x8xf32>
    %15 = vector.shape_cast %14 : vector<1x144x8xf32> to vector<144x8xf32>
    %c0_16 = arith.constant 0 : index
    %c38 = arith.constant 38 : index
    %c0_17 = arith.constant 0 : index
    %16 = vector.load %arg1[%c0_16, %c38, %c0_17] : memref<1x182x8xf32, #tpu.memory_space<vmem>>, vector<1x144x8xf32>
    %17 = vector.shape_cast %16 : vector<1x144x8xf32> to vector<144x8xf32>
    %18 = tpu.concatenate %1, %3, %5, %7, %9, %11, %13, %15, %17 in 1 : vector<144x8xf32>, vector<144x8xf32>, vector<144x8xf32>, vector<144x8xf32>, vector<144x8xf32>, vector<144x8xf32>, vector<144x8xf32>, vector<144x8xf32>, vector<144x8xf32> -> vector<144x72xf32>
    %c0_18 = arith.constant 0 : index
    %c0_19 = arith.constant 0 : index
    %19 = vector.load %arg2[%c0_18, %c0_19] : memref<72x128xf32, #tpu.memory_space<vmem>>, vector<72x128xf32>
    %cst = arith.constant dense<0.000000e+00> : vector<144x128xf32>
    %20 = tpu.matmul %18, %19, %cst {dimension_numbers = #tpu.dot_dimension_numbers<[1], [0], [0], [1], [0, 0, 1, 1], [], []>} : vector<144x72xf32>, vector<72x128xf32>, vector<144x128xf32> -> vector<144x128xf32>
    %21 = vector.extract_strided_slice %20 {offsets = [0, 0], sizes = [144, 8], strides = [1, 1]} : vector<144x128xf32> to vector<144x8xf32>
    %c0_20 = arith.constant 0 : index
    %c0_21 = arith.constant 0 : index
    %22 = vector.load %arg3[%c0_20, %c0_21] : memref<2x8xf32, #tpu.memory_space<vmem>>, vector<1x8xf32>
    %c1_22 = arith.constant 1 : index
    %c0_23 = arith.constant 0 : index
    %23 = vector.load %arg3[%c1_22, %c0_23] : memref<2x8xf32, #tpu.memory_space<vmem>>, vector<1x8xf32>
    %24 = vector.broadcast %22 : vector<1x8xf32> to vector<144x8xf32>
    %25 = arith.mulf %21, %24 : vector<144x8xf32>
    %26 = vector.broadcast %23 : vector<1x8xf32> to vector<144x8xf32>
    %27 = arith.addf %25, %26 : vector<144x8xf32>
    %cst_24 = arith.constant 0.000000e+00 : f32
    %28 = vector.broadcast %cst_24 : f32 to vector<144x8xf32>
    %29 = arith.maximumf %27, %28 : vector<144x8xf32>
    %c0_25 = arith.constant 0 : index
    %c0_26 = arith.constant 0 : index
    %c0_27 = arith.constant 0 : index
    %30 = vector.load %arg4[%c0_25, %c0_26, %c0_27] : memref<1x144x8xf32, #tpu.memory_space<vmem>>, vector<1x144x8xf32>
    %31 = vector.shape_cast %30 : vector<1x144x8xf32> to vector<144x8xf32>
    %32 = vector.shape_cast %29 : vector<144x8xf32> to vector<1x144x8xf32>
    tpu.vector_store %arg4[%c0_25, %c0_26, %c0_27], %32 {strides = array<i32>} : memref<1x144x8xf32, #tpu.memory_space<vmem>>, vector<1x144x8xf32>,
    return
  }
  func.func @transform_0(%arg0: i32) -> (i32, i32, i32) {
    %c0_i32 = arith.constant 0 : i32
    %c0_i32_0 = arith.constant 0 : i32
    %c0_i32_1 = arith.constant 0 : i32
    return %arg0, %c0_i32, %c0_i32_0 : i32, i32, i32
  }
  func.func @transform_1(%arg0: i32) -> (i32, i32) {
    %c0_i32 = arith.constant 0 : i32
    %c0_i32_0 = arith.constant 0 : i32
    %c0_i32_1 = arith.constant 0 : i32
    return %c0_i32, %c0_i32_0 : i32, i32
  }
  func.func @transform_2(%arg0: i32) -> (i32, i32) {
    %c0_i32 = arith.constant 0 : i32
    %c0_i32_0 = arith.constant 0 : i32
    %c0_i32_1 = arith.constant 0 : i32
    return %c0_i32, %c0_i32_0 : i32, i32
  }
  func.func @transform_3(%arg0: i32) -> (i32, i32, i32) {
    %c0_i32 = arith.constant 0 : i32
    %c0_i32_0 = arith.constant 0 : i32
    %c0_i32_1 = arith.constant 0 : i32
    return %arg0, %c0_i32, %c0_i32_0 : i32, i32, i32
  }
}

</mosaic_0001>

<llo_original>
// kernel: conv_block_forward.3
$region0: #{conv_block_forward.3}
  #allocation0 [shape = 'u32[]', space=smem, size = 0x4, offset = 0x4, fixed_abs, tag = 'smem constant byte address 0x4 - core index']
  #allocation1 [shape = 'u32[72,128]{1,0:T(1,128)}', space=vmem, size = 0x9000, scoped, tag = 'internal scratch']
  %s0 = inlined_call_operand.vmem [shape: f32[4,182,8], index: 0, kind: input, shape index: {}]
  %s1 = inlined_call_operand.vmem [shape: f32[72,128], index: 1, kind: input, shape index: {}]
  %s2 = inlined_call_operand.vmem [shape: f32[2,8], index: 2, kind: input, shape index: {}]
  %s3 = inlined_call_operand.vmem [shape: f32[4,144,8], index: 3, kind: output, shape index: {}]
  %s4 = sld [smem:[#allocation0]]
  $region45: #{conv_block_forward.3} parent=0
    _
  %s6 = ssub.s32 1, %s4
  %s7 = scalar_select 0, %s6, %s4
  loop: start=0, step=1, limit=6
  $region2: #{conv_block_forward.3} parent=0 // loop_pre_header
    _
  $region3: #{conv_block_forward.3} parent=0 // loop_header
    %s9 = sphi 0, %s13
    %p10 = scmp.ge.s32.totalorder %s9, 6
    %s19 = sphi 0, %s21
    %s22 = sphi 0, %s19
    %s23 = sphi 0, %s22
    %s39 = sphi 0, %s23
    %s43 = sphi 0, %s43
    %s45 = sphi 0, %s43
    %s46 = sphi 0, %s45
    %s60 = sphi 0, %s46
    %s64 = sphi 0, %s64
    %s66 = sphi 0, %s64
    %s67 = sphi 0, %s66
    %s81 = sphi 0, %s67
    %s87 = sphi 0, %s89
    %s90 = sphi 0, %s87
    %s91 = sphi 0, %s90
    %s107 = sphi 0, %s91
  $region4: #{conv_block_forward.3} parent=0 // loop_header_branch
    %12 = sbr.rel (%p10) target = $region8
  $region5: #{conv_block_forward.3} parent=0 // loop_body
    %s14 = ssub.s32 %s9, 1
    %s15 = ssub.s32 %s9, 2
    %s16 = sadd.s32 %s9, 1
    %s17 = ssub.s32 %s9, %s16
    %p18 = scmp.eq.s32.totalorder %s17, 0
    %s20 = sadd.s32 %s19, 1
    %s21 = scalar_select %p18, %s19, %s20
    %p24 = pneg %p18
    %p25 = scmp.eq.s32.totalorder %s9, 3
    %p26 = por %p24, %p25
    %p27 = scmp.ne.s32.totalorder %s19, %s22
    %p28 = scmp.eq.s32.totalorder %s9, 0
    %p29 = por %p27, %p28
    %p30 = scmp.ne.s32.totalorder %s19, %s22
    %p31 = scmp.eq.s32.totalorder %s14, 3
    %p32 = por %p30, %p31
    %p33 = scmp.ne.s32.totalorder %s22, %s23
    %p34 = scmp.eq.s32.totalorder %s14, 0
    %p35 = por %p33, %p34
    %p36 = scmp.ne.s32.totalorder %s22, %s23
    %p37 = scmp.eq.s32.totalorder %s15, 3
    %p38 = por %p36, %p37
    %p40 = scmp.ne.s32.totalorder %s23, %s39
    %p41 = scmp.eq.s32.totalorder %s15, 0
    %p42 = por %p40, %p41
    %s44 = sadd.s32 %s43, 1
    %p47 = scmp.eq.s32.totalorder %s9, 3
    %p48 = scmp.ne.s32.totalorder %s43, %s45
    %p49 = scmp.eq.s32.totalorder %s9, 0
    %p50 = por %p48, %p49
    %p51 = scmp.ne.s32.totalorder %s43, %s45
    %p52 = scmp.eq.s32.totalorder %s14, 3
    %p53 = por %p51, %p52
    %p54 = scmp.ne.s32.totalorder %s45, %s46
    %p55 = scmp.eq.s32.totalorder %s14, 0
    %p56 = por %p54, %p55
    %p57 = scmp.ne.s32.totalorder %s45, %s46
    %p58 = scmp.eq.s32.totalorder %s15, 3
    %p59 = por %p57, %p58
    %p61 = scmp.ne.s32.totalorder %s46, %s60
    %p62 = scmp.eq.s32.totalorder %s15, 0
    %p63 = por %p61, %p62
    %s65 = sadd.s32 %s64, 1
    %p68 = scmp.eq.s32.totalorder %s9, 3
    %p69 = scmp.ne.s32.totalorder %s64, %s66
    %p70 = scmp.eq.s32.totalorder %s9, 0
    %p71 = por %p69, %p70
    %p72 = scmp.ne.s32.totalorder %s64, %s66
    %p73 = scmp.eq.s32.totalorder %s14, 3
    %p74 = por %p72, %p73
    %p75 = scmp.ne.s32.totalorder %s66, %s67
    %p76 = scmp.eq.s32.totalorder %s14, 0
    %p77 = por %p75, %p76
    %p78 = scmp.ne.s32.totalorder %s66, %s67
    %p79 = scmp.eq.s32.totalorder %s15, 3
    %p80 = por %p78, %p79
    %p82 = scmp.ne.s32.totalorder %s67, %s81
    %p83 = scmp.eq.s32.totalorder %s15, 0
    %p84 = por %p82, %p83
    %s85 = ssub.s32 %s9, %s16
    %p86 = scmp.eq.s32.totalorder %s85, 0
    %s88 = sadd.s32 %s87, 1
    %s89 = scalar_select %p86, %s87, %s88
    %p92 = pneg %p86
    %p93 = scmp.eq.s32.totalorder %s9, 3
    %p94 = por %p92, %p93
    %p95 = scmp.ne.s32.totalorder %s87, %s90
    %p96 = scmp.eq.s32.totalorder %s9, 0
    %p97 = por %p95, %p96
    %p98 = scmp.ne.s32.totalorder %s87, %s90
    %p99 = scmp.eq.s32.totalorder %s14, 3
    %p100 = por %p98, %p99
    %p101 = scmp.ne.s32.totalorder %s90, %s91
    %p102 = scmp.eq.s32.totalorder %s14, 0
    %p103 = por %p101, %p102
    %p104 = scmp.ne.s32.totalorder %s90, %s91
    %p105 = scmp.eq.s32.totalorder %s15, 3
    %p106 = por %p104, %p105
    %p108 = scmp.ne.s32.totalorder %s91, %s107
    %p109 = scmp.eq.s32.totalorder %s15, 0
    %p110 = por %p108, %p109
    %p111 = scmp.le.s32.totalorder 1, %s9
    %p112 = scmp.lt.s32.totalorder %s9, 5
    %p113 = pnand %p111, %p112
    %p114 = pneg %p113
    // Predicated region
    $region9: #{conv_block_forward.3} parent=5 // pred_check
      _
    $region10: #{conv_block_forward.3} parent=5 // pred_check_branch
      %116 = sbr.rel (%p113) target = $region12
    $region11: #{conv_block_forward.3} parent=5 // pred_region
      %s117 = ssub.s32 %s9, 1
      // Predicated region
      $region13: #{conv_block_forward.3} parent=11 // pred_check
        %p118 = pneg %p56
      $region14: #{conv_block_forward.3} parent=11 // pred_check_branch
        %120 = sbr.rel (%p118) target = $region16
      $region15: #{conv_block_forward.3} parent=11 // pred_region
        _
      $region16: #{conv_block_forward.3} parent=11 // pred_fallthru
        _
      // Predicated region
      $region17: #{conv_block_forward.3} parent=11 // pred_check
        %p121 = pneg %p77
      $region18: #{conv_block_forward.3} parent=11 // pred_check_branch
        %123 = sbr.rel (%p121) target = $region20
      $region19: #{conv_block_forward.3} parent=11 // pred_region
        _
      $region20: #{conv_block_forward.3} parent=11 // pred_fallthru
        _
    $region12: #{conv_block_forward.3} parent=5 // pred_fallthru
      _
    %p124 = scmp.lt.s32.totalorder %s9, 4
    // Predicated region
    $region21: #{conv_block_forward.3} parent=5 // pred_check
      %p125 = pneg %p124
    $region22: #{conv_block_forward.3} parent=5 // pred_check_branch
      %127 = sbr.rel (%p125) target = $region24
    $region23: #{conv_block_forward.3} parent=5 // pred_region
      // Predicated region
      $region25: #{conv_block_forward.3} parent=23 // pred_check
        %p128 = pneg %p29
      $region26: #{conv_block_forward.3} parent=23 // pred_check_branch
        %130 = sbr.rel (%p128) target = $region28
      $region27: #{conv_block_forward.3} parent=23 // pred_region
        %p131 = scmp.lt.s32.totalorder %s9, 3
        %s132 = scalar_select %p131, %s9, 3
        %s133 = smul.addr %s132, 23
        %s134 = smul.addr %s133, 8
        %s135 = scalar_lea.vmem %s0, %s134
      $region28: #{conv_block_forward.3} parent=23 // pred_fallthru
        _
    $region24: #{conv_block_forward.3} parent=5 // pred_fallthru
      _
    %p136 = scmp.le.s32.totalorder 1, %s9
    %p137 = scmp.lt.s32.totalorder %s9, 5
    %p138 = pnand %p136, %p137
    %p139 = pneg %p138
    // Predicated region
    $region29: #{conv_block_forward.3} parent=5 // pred_check
      _
    $region30: #{conv_block_forward.3} parent=5 // pred_check_branch
      %141 = sbr.rel (%p138) target = $region32
    $region31: #{conv_block_forward.3} parent=5 // pred_region
      %s142 = ssub.s32 %s9, 1
      %p143 = scmp.lt.s32.totalorder %s14, 3
      %s144 = scalar_select %p143, %s14, 3
      %s145 = smul.addr %s144, 23
      %s146 = smul.addr %s145, 8
      %s147 = scalar_lea.vmem %s0, %s146
      %p148 = pneg %p35
      %p149 = pneg %p32
      %p150 = pneg %p56
      %p151 = pneg %p53
      %p152 = pneg %p77
      %p153 = pneg %p74
      %p154 = pneg %p103
      %p155 = pneg %p100
      %p156 = scmp.lt.s32.totalorder %s14, 3
      %s157 = scalar_select %p156, %s14, 3
      %s158 = smul.addr %s157, 18
      %s159 = smul.addr %s158, 8
      %s160 = scalar_lea.vmem %s3, %s159
      %p161 = scmp.lt.s32.totalorder %s14, 3
      %s162 = scalar_select %p161, %s14, 3
      %s163 = smul.addr %s162, 23
      %s164 = smul.addr %s163, 8
      %s165 = scalar_lea.vmem %s0, %s164
      %p166 = scmp.lt.s32.totalorder %s14, 3
      %s167 = scalar_select %p166, %s14, 3
      %s168 = smul.addr %s167, 18
      %s169 = smul.addr %s168, 8
      %s170 = scalar_lea.vmem %s3, %s169
      %v171 = vld [vmem:[%s165] sm:$0xff]
      %v172 = vld [vmem:[%s165 + $0x8] sm:$0xff]
      %v173 = vld [vmem:[%s165 + $0x10] sm:$0xff]
      %v174 = vld [vmem:[%s165 + $0x18] sm:$0xff]
      %v175 = vld [vmem:[%s165 + $0x20] sm:$0xff]
      %v176 = vld [vmem:[%s165 + $0x28] sm:$0xff]
      %v177 = vld [vmem:[%s165 + $0x30] sm:$0xff]
      %v178 = vld [vmem:[%s165 + $0x38] sm:$0xff]
      %v179 = vld [vmem:[%s165 + $0x40] sm:$0xff]
      %v180 = vld [vmem:[%s165 + $0x48] sm:$0xff]
      %v181 = vld [vmem:[%s165 + $0x50] sm:$0xff]
      %v182 = vld [vmem:[%s165 + $0x58] sm:$0xff]
      %v183 = vld [vmem:[%s165 + $0x60] sm:$0xff]
      %v184 = vld [vmem:[%s165 + $0x68] sm:$0xff]
      %v185 = vld [vmem:[%s165 + $0x70] sm:$0xff]
      %v186 = vld [vmem:[%s165 + $0x78] sm:$0xff]
      %v187 = vld [vmem:[%s165 + $0x80] sm:$0xff]
      %v188 = vld [vmem:[%s165 + $0x88] sm:$0xff]
      %v189 = vld [vmem:[%s165 + $0x1] sm:$0xff]
      %v190 = vld [vmem:[%s165 + $0x9] sm:$0xff]
      %v191 = vld [vmem:[%s165 + $0x11] sm:$0xff]
      %v192 = vld [vmem:[%s165 + $0x19] sm:$0xff]
      %v193 = vld [vmem:[%s165 + $0x21] sm:$0xff]
      %v194 = vld [vmem:[%s165 + $0x29] sm:$0xff]
      %v195 = vld [vmem:[%s165 + $0x31] sm:$0xff]
      %v196 = vld [vmem:[%s165 + $0x39] sm:$0xff]
      %v197 = vld [vmem:[%s165 + $0x41] sm:$0xff]
      %v198 = vld [vmem:[%s165 + $0x49] sm:$0xff]
      %v199 = vld [vmem:[%s165 + $0x51] sm:$0xff]
      %v200 = vld [vmem:[%s165 + $0x59] sm:$0xff]
      %v201 = vld [vmem:[%s165 + $0x61] sm:$0xff]
      %v202 = vld [vmem:[%s165 + $0x69] sm:$0xff]
      %v203 = vld [vmem:[%s165 + $0x71] sm:$0xff]
      %v204 = vld [vmem:[%s165 + $0x79] sm:$0xff]
      %v205 = vld [vmem:[%s165 + $0x81] sm:$0xff]
      %v206 = vld [vmem:[%s165 + $0x89] sm:$0xff]
      %v207 = vld [vmem:[%s165 + $0x2] sm:$0xff]
      %v208 = vld [vmem:[%s165 + $0xa] sm:$0xff]
      %v209 = vld [vmem:[%s165 + $0x12] sm:$0xff]
      %v210 = vld [vmem:[%s165 + $0x1a] sm:$0xff]
      %v211 = vld [vmem:[%s165 + $0x22] sm:$0xff]
      %v212 = vld [vmem:[%s165 + $0x2a] sm:$0xff]
      %v213 = vld [vmem:[%s165 + $0x32] sm:$0xff]
      %v214 = vld [vmem:[%s165 + $0x3a] sm:$0xff]
      %v215 = vld [vmem:[%s165 + $0x42] sm:$0xff]
      %v216 = vld [vmem:[%s165 + $0x4a] sm:$0xff]
      %v217 = vld [vmem:[%s165 + $0x52] sm:$0xff]
      %v218 = vld [vmem:[%s165 + $0x5a] sm:$0xff]
      %v219 = vld [vmem:[%s165 + $0x62] sm:$0xff]
      %v220 = vld [vmem:[%s165 + $0x6a] sm:$0xff]
      %v221 = vld [vmem:[%s165 + $0x72] sm:$0xff]
      %v222 = vld [vmem:[%s165 + $0x7a] sm:$0xff]
      %v223 = vld [vmem:[%s165 + $0x82] sm:$0xff]
      %v224 = vld [vmem:[%s165 + $0x8a] sm:$0xff]
      %v225 = vld [vmem:[%s165 + $0x92] sm:$0xff]
      %v226 = vld [vmem:[%s165 + $0x9a] sm:$0xff]
      %v227 = vld [vmem:[%s165 + $0x13] sm:$0xff]
      %v228 = vld [vmem:[%s165 + $0x1b] sm:$0xff]
      %v229 = vld [vmem:[%s165 + $0x23] sm:$0xff]
      %v230 = vld [vmem:[%s165 + $0x2b] sm:$0xff]
      %v231 = vld [vmem:[%s165 + $0x33] sm:$0xff]
      %v232 = vld [vmem:[%s165 + $0x3b] sm:$0xff]
      %v233 = vld [vmem:[%s165 + $0x43] sm:$0xff]
      %v234 = vld [vmem:[%s165 + $0x4b] sm:$0xff]
      %v235 = vld [vmem:[%s165 + $0x53] sm:$0xff]
      %v236 = vld [vmem:[%s165 + $0x5b] sm:$0xff]
      %v237 = vld [vmem:[%s165 + $0x63] sm:$0xff]
      %v238 = vld [vmem:[%s165 + $0x6b] sm:$0xff]
      %v239 = vld [vmem:[%s165 + $0x73] sm:$0xff]
      %v240 = vld [vmem:[%s165 + $0x7b] sm:$0xff]
      %v241 = vld [vmem:[%s165 + $0x83] sm:$0xff]
      %v242 = vld [vmem:[%s165 + $0x8b] sm:$0xff]
      %v243 = vld [vmem:[%s165 + $0x93] sm:$0xff]
      %v244 = vld [vmem:[%s165 + $0x9b] sm:$0xff]
      %v245 = vld [vmem:[%s165 + $0x14] sm:$0xff]
      %v246 = vld [vmem:[%s165 + $0x1c] sm:$0xff]
      %v247 = vld [vmem:[%s165 + $0x24] sm:$0xff]
      %v248 = vld [vmem:[%s165 + $0x2c] sm:$0xff]
      %v249 = vld [vmem:[%s165 + $0x34] sm:$0xff]
      %v250 = vld [vmem:[%s165 + $0x3c] sm:$0xff]
      %v251 = vld [vmem:[%s165 + $0x44] sm:$0xff]
      %v252 = vld [vmem:[%s165 + $0x4c] sm:$0xff]
      %v253 = vld [vmem:[%s165 + $0x54] sm:$0xff]
      %v254 = vld [vmem:[%s165 + $0x5c] sm:$0xff]
      %v255 = vld [vmem:[%s165 + $0x64] sm:$0xff]
      %v256 = vld [vmem:[%s165 + $0x6c] sm:$0xff]
      %v257 = vld [vmem:[%s165 + $0x74] sm:$0xff]
      %v258 = vld [vmem:[%s165 + $0x7c] sm:$0xff]
      %v259 = vld [vmem:[%s165 + $0x84] sm:$0xff]
      %v260 = vld [vmem:[%s165 + $0x8c] sm:$0xff]
      %v261 = vld [vmem:[%s165 + $0x94] sm:$0xff]
      %v262 = vld [vmem:[%s165 + $0x9c] sm:$0xff]
      %v263 = vld [vmem:[%s165 + $0xa4] sm:$0xff]
      %v264 = vld [vmem:[%s165 + $0xac] sm:$0xff]
      %v265 = vld [vmem:[%s165 + $0x25] sm:$0xff]
      %v266 = vld [vmem:[%s165 + $0x2d] sm:$0xff]
      %v267 = vld [vmem:[%s165 + $0x35] sm:$0xff]
      %v268 = vld [vmem:[%s165 + $0x3d] sm:$0xff]
      %v269 = vld [vmem:[%s165 + $0x45] sm:$0xff]
      %v270 = vld [vmem:[%s165 + $0x4d] sm:$0xff]
      %v271 = vld [vmem:[%s165 + $0x55] sm:$0xff]
      %v272 = vld [vmem:[%s165 + $0x5d] sm:$0xff]
      %v273 = vld [vmem:[%s165 + $0x65] sm:$0xff]
      %v274 = vld [vmem:[%s165 + $0x6d] sm:$0xff]
      %v275 = vld [vmem:[%s165 + $0x75] sm:$0xff]
      %v276 = vld [vmem:[%s165 + $0x7d] sm:$0xff]
      %v277 = vld [vmem:[%s165 + $0x85] sm:$0xff]
      %v278 = vld [vmem:[%s165 + $0x8d] sm:$0xff]
      %v279 = vld [vmem:[%s165 + $0x95] sm:$0xff]
      %v280 = vld [vmem:[%s165 + $0x9d] sm:$0xff]
      %v281 = vld [vmem:[%s165 + $0xa5] sm:$0xff]
      %v282 = vld [vmem:[%s165 + $0xad] sm:$0xff]
      %v283 = vld [vmem:[%s165 + $0x26] sm:$0xff]
      %v284 = vld [vmem:[%s165 + $0x2e] sm:$0xff]
      %v285 = vld [vmem:[%s165 + $0x36] sm:$0xff]
      %v286 = vld [vmem:[%s165 + $0x3e] sm:$0xff]
      %v287 = vld [vmem:[%s165 + $0x46] sm:$0xff]
      %v288 = vld [vmem:[%s165 + $0x4e] sm:$0xff]
      %v289 = vld [vmem:[%s165 + $0x56] sm:$0xff]
      %v290 = vld [vmem:[%s165 + $0x5e] sm:$0xff]
      %v291 = vld [vmem:[%s165 + $0x66] sm:$0xff]
      %v292 = vld [vmem:[%s165 + $0x6e] sm:$0xff]
      %v293 = vld [vmem:[%s165 + $0x76] sm:$0xff]
      %v294 = vld [vmem:[%s165 + $0x7e] sm:$0xff]
      %v295 = vld [vmem:[%s165 + $0x86] sm:$0xff]
      %v296 = vld [vmem:[%s165 + $0x8e] sm:$0xff]
      %v297 = vld [vmem:[%s165 + $0x96] sm:$0xff]
      %v298 = vld [vmem:[%s165 + $0x9e] sm:$0xff]
      %v299 = vld [vmem:[%s165 + $0xa6] sm:$0xff]
      %v300 = vld [vmem:[%s165 + $0xae] sm:$0xff]
      %319 = vrot.lane.b32.xlu0 %v189, 8
      %v320 = vpop.permute.xlu0 %319
      %321 = vrot.lane.b32.xlu0 %v190, 8
      %v322 = vpop.permute.xlu0 %321
      %323 = vrot.lane.b32.xlu0 %v191, 8
      %v324 = vpop.permute.xlu0 %323
      %325 = vrot.lane.b32.xlu0 %v192, 8
      %v326 = vpop.permute.xlu0 %325
      %327 = vrot.lane.b32.xlu0 %v193, 8
      %v328 = vpop.permute.xlu0 %327
      %329 = vrot.lane.b32.xlu0 %v194, 8
      %v330 = vpop.permute.xlu0 %329
      %331 = vrot.lane.b32.xlu0 %v195, 8
      %v332 = vpop.permute.xlu0 %331
      %333 = vrot.lane.b32.xlu0 %v196, 8
      %v334 = vpop.permute.xlu0 %333
      %335 = vrot.lane.b32.xlu0 %v197, 8
      %v336 = vpop.permute.xlu0 %335
      %337 = vrot.lane.b32.xlu0 %v198, 8
      %v338 = vpop.permute.xlu0 %337
      %339 = vrot.lane.b32.xlu0 %v199, 8
      %v340 = vpop.permute.xlu0 %339
      %341 = vrot.lane.b32.xlu0 %v200, 8
      %v342 = vpop.permute.xlu0 %341
      %343 = vrot.lane.b32.xlu0 %v201, 8
      %v344 = vpop.permute.xlu0 %343
      %345 = vrot.lane.b32.xlu0 %v202, 8
      %v346 = vpop.permute.xlu0 %345
      %347 = vrot.lane.b32.xlu0 %v203, 8
      %v348 = vpop.permute.xlu0 %347
      %349 = vrot.lane.b32.xlu0 %v204, 8
      %v350 = vpop.permute.xlu0 %349
      %351 = vrot.lane.b32.xlu0 %v205, 8
      %v352 = vpop.permute.xlu0 %351
      %353 = vrot.lane.b32.xlu0 %v206, 8
      %v354 = vpop.permute.xlu0 %353
      %391 = vrot.lane.b32.xlu0 %v207, 16
      %v392 = vpop.permute.xlu0 %391
      %393 = vrot.lane.b32.xlu0 %v208, 16
      %v394 = vpop.permute.xlu0 %393
      %395 = vrot.lane.b32.xlu0 %v209, 16
      %v396 = vpop.permute.xlu0 %395
      %397 = vrot.lane.b32.xlu0 %v210, 16
      %v398 = vpop.permute.xlu0 %397
      %399 = vrot.lane.b32.xlu0 %v211, 16
      %v400 = vpop.permute.xlu0 %399
      %401 = vrot.lane.b32.xlu0 %v212, 16
      %v402 = vpop.permute.xlu0 %401
      %403 = vrot.lane.b32.xlu0 %v213, 16
      %v404 = vpop.permute.xlu0 %403
      %405 = vrot.lane.b32.xlu0 %v214, 16
      %v406 = vpop.permute.xlu0 %405
      %407 = vrot.lane.b32.xlu0 %v215, 16
      %v408 = vpop.permute.xlu0 %407
      %409 = vrot.lane.b32.xlu0 %v216, 16
      %v410 = vpop.permute.xlu0 %409
      %411 = vrot.lane.b32.xlu0 %v217, 16
      %v412 = vpop.permute.xlu0 %411
      %413 = vrot.lane.b32.xlu0 %v218, 16
      %v414 = vpop.permute.xlu0 %413
      %415 = vrot.lane.b32.xlu0 %v219, 16
      %v416 = vpop.permute.xlu0 %415
      %417 = vrot.lane.b32.xlu0 %v220, 16
      %v418 = vpop.permute.xlu0 %417
      %419 = vrot.lane.b32.xlu0 %v221, 16
      %v420 = vpop.permute.xlu0 %419
      %421 = vrot.lane.b32.xlu0 %v222, 16
      %v422 = vpop.permute.xlu0 %421
      %423 = vrot.lane.b32.xlu0 %v223, 16
      %v424 = vpop.permute.xlu0 %423
      %425 = vrot.lane.b32.xlu0 %v224, 16
      %v426 = vpop.permute.xlu0 %425
      %447 = vrot.lane.b32.xlu0 %v209, 24
      %v448 = vpop.permute.xlu0 %447
      %449 = vrot.lane.b32.xlu0 %v210, 24
      %v450 = vpop.permute.xlu0 %449
      %451 = vrot.lane.b32.xlu0 %v211, 24
      %v452 = vpop.permute.xlu0 %451
      %453 = vrot.lane.b32.xlu0 %v212, 24
      %v454 = vpop.permute.xlu0 %453
      %455 = vrot.lane.b32.xlu0 %v213, 24
      %v456 = vpop.permute.xlu0 %455
      %457 = vrot.lane.b32.xlu0 %v214, 24
      %v458 = vpop.permute.xlu0 %457
      %459 = vrot.lane.b32.xlu0 %v215, 24
      %v460 = vpop.permute.xlu0 %459
      %461 = vrot.lane.b32.xlu0 %v216, 24
      %v462 = vpop.permute.xlu0 %461
      %463 = vrot.lane.b32.xlu0 %v217, 24
      %v464 = vpop.permute.xlu0 %463
      %465 = vrot.lane.b32.xlu0 %v218, 24
      %v466 = vpop.permute.xlu0 %465
      %467 = vrot.lane.b32.xlu0 %v219, 24
      %v468 = vpop.permute.xlu0 %467
      %469 = vrot.lane.b32.xlu0 %v220, 24
      %v470 = vpop.permute.xlu0 %469
      %471 = vrot.lane.b32.xlu0 %v221, 24
      %v472 = vpop.permute.xlu0 %471
      %473 = vrot.lane.b32.xlu0 %v222, 24
      %v474 = vpop.permute.xlu0 %473
      %475 = vrot.lane.b32.xlu0 %v223, 24
      %v476 = vpop.permute.xlu0 %475
      %477 = vrot.lane.b32.xlu0 %v224, 24
      %v478 = vpop.permute.xlu0 %477
      %479 = vrot.lane.b32.xlu0 %v225, 24
      %v480 = vpop.permute.xlu0 %479
      %481 = vrot.lane.b32.xlu0 %v226, 24
      %v482 = vpop.permute.xlu0 %481
      %519 = vrot.lane.b32.xlu0 %v227, 32
      %v520 = vpop.permute.xlu0 %519
      %521 = vrot.lane.b32.xlu0 %v228, 32
      %v522 = vpop.permute.xlu0 %521
      %523 = vrot.lane.b32.xlu0 %v229, 32
      %v524 = vpop.permute.xlu0 %523
      %525 = vrot.lane.b32.xlu0 %v230, 32
      %v526 = vpop.permute.xlu0 %525
      %527 = vrot.lane.b32.xlu0 %v231, 32
      %v528 = vpop.permute.xlu0 %527
      %529 = vrot.lane.b32.xlu0 %v232, 32
      %v530 = vpop.permute.xlu0 %529
      %531 = vrot.lane.b32.xlu0 %v233, 32
      %v532 = vpop.permute.xlu0 %531
      %533 = vrot.lane.b32.xlu0 %v234, 32
      %v534 = vpop.permute.xlu0 %533
      %535 = vrot.lane.b32.xlu0 %v235, 32
      %v536 = vpop.permute.xlu0 %535
      %537 = vrot.lane.b32.xlu0 %v236, 32
      %v538 = vpop.permute.xlu0 %537
      %539 = vrot.lane.b32.xlu0 %v237, 32
      %v540 = vpop.permute.xlu0 %539
      %541 = vrot.lane.b32.xlu0 %v238, 32
      %v542 = vpop.permute.xlu0 %541
      %543 = vrot.lane.b32.xlu0 %v239, 32
      %v544 = vpop.permute.xlu0 %543
      %545 = vrot.lane.b32.xlu0 %v240, 32
      %v546 = vpop.permute.xlu0 %545
      %547 = vrot.lane.b32.xlu0 %v241, 32
      %v548 = vpop.permute.xlu0 %547
      %549 = vrot.lane.b32.xlu0 %v242, 32
      %v550 = vpop.permute.xlu0 %549
      %551 = vrot.lane.b32.xlu0 %v243, 32
      %v552 = vpop.permute.xlu0 %551
      %553 = vrot.lane.b32.xlu0 %v244, 32
      %v554 = vpop.permute.xlu0 %553
      %591 = vrot.lane.b32.xlu0 %v245, 40
      %v592 = vpop.permute.xlu0 %591
      %593 = vrot.lane.b32.xlu0 %v246, 40
      %v594 = vpop.permute.xlu0 %593
      %595 = vrot.lane.b32.xlu0 %v247, 40
      %v596 = vpop.permute.xlu0 %595
      %597 = vrot.lane.b32.xlu0 %v248, 40
      %v598 = vpop.permute.xlu0 %597
      %599 = vrot.lane.b32.xlu0 %v249, 40
      %v600 = vpop.permute.xlu0 %599
      %601 = vrot.lane.b32.xlu0 %v250, 40
      %v602 = vpop.permute.xlu0 %601
      %603 = vrot.lane.b32.xlu0 %v251, 40
      %v604 = vpop.permute.xlu0 %603
      %605 = vrot.lane.b32.xlu0 %v252, 40
      %v606 = vpop.permute.xlu0 %605
      %607 = vrot.lane.b32.xlu0 %v253, 40
      %v608 = vpop.permute.xlu0 %607
      %609 = vrot.lane.b32.xlu0 %v254, 40
      %v610 = vpop.permute.xlu0 %609
      %611 = vrot.lane.b32.xlu0 %v255, 40
      %v612 = vpop.permute.xlu0 %611
      %613 = vrot.lane.b32.xlu0 %v256, 40
      %v614 = vpop.permute.xlu0 %613
      %615 = vrot.lane.b32.xlu0 %v257, 40
      %v616 = vpop.permute.xlu0 %615
      %617 = vrot.lane.b32.xlu0 %v258, 40
      %v618 = vpop.permute.xlu0 %617
      %619 = vrot.lane.b32.xlu0 %v259, 40
      %v620 = vpop.permute.xlu0 %619
      %621 = vrot.lane.b32.xlu0 %v260, 40
      %v622 = vpop.permute.xlu0 %621
      %623 = vrot.lane.b32.xlu0 %v261, 40
      %v624 = vpop.permute.xlu0 %623
      %625 = vrot.lane.b32.xlu0 %v262, 40
      %v626 = vpop.permute.xlu0 %625
      %647 = vrot.lane.b32.xlu0 %v247, 48
      %v648 = vpop.permute.xlu0 %647
      %649 = vrot.lane.b32.xlu0 %v248, 48
      %v650 = vpop.permute.xlu0 %649
      %651 = vrot.lane.b32.xlu0 %v249, 48
      %v652 = vpop.permute.xlu0 %651
      %653 = vrot.lane.b32.xlu0 %v250, 48
      %v654 = vpop.permute.xlu0 %653
      %655 = vrot.lane.b32.xlu0 %v251, 48
      %v656 = vpop.permute.xlu0 %655
      %657 = vrot.lane.b32.xlu0 %v252, 48
      %v658 = vpop.permute.xlu0 %657
      %659 = vrot.lane.b32.xlu0 %v253, 48
      %v660 = vpop.permute.xlu0 %659
      %661 = vrot.lane.b32.xlu0 %v254, 48
      %v662 = vpop.permute.xlu0 %661
      %663 = vrot.lane.b32.xlu0 %v255, 48
      %v664 = vpop.permute.xlu0 %663
      %665 = vrot.lane.b32.xlu0 %v256, 48
      %v666 = vpop.permute.xlu0 %665
      %667 = vrot.lane.b32.xlu0 %v257, 48
      %v668 = vpop.permute.xlu0 %667
      %669 = vrot.lane.b32.xlu0 %v258, 48
      %v670 = vpop.permute.xlu0 %669
      %671 = vrot.lane.b32.xlu0 %v259, 48
      %v672 = vpop.permute.xlu0 %671
      %673 = vrot.lane.b32.xlu0 %v260, 48
      %v674 = vpop.permute.xlu0 %673
      %675 = vrot.lane.b32.xlu0 %v261, 48
      %v676 = vpop.permute.xlu0 %675
      %677 = vrot.lane.b32.xlu0 %v262, 48
      %v678 = vpop.permute.xlu0 %677
      %679 = vrot.lane.b32.xlu0 %v263, 48
      %v680 = vpop.permute.xlu0 %679
      %681 = vrot.lane.b32.xlu0 %v264, 48
      %v682 = vpop.permute.xlu0 %681
      %719 = vrot.lane.b32.xlu0 %v265, 56
      %v720 = vpop.permute.xlu0 %719
      %721 = vrot.lane.b32.xlu0 %v266, 56
      %v722 = vpop.permute.xlu0 %721
      %723 = vrot.lane.b32.xlu0 %v267, 56
      %v724 = vpop.permute.xlu0 %723
      %725 = vrot.lane.b32.xlu0 %v268, 56
      %v726 = vpop.permute.xlu0 %725
      %727 = vrot.lane.b32.xlu0 %v269, 56
      %v728 = vpop.permute.xlu0 %727
      %729 = vrot.lane.b32.xlu0 %v270, 56
      %v730 = vpop.permute.xlu0 %729
      %731 = vrot.lane.b32.xlu0 %v271, 56
      %v732 = vpop.permute.xlu0 %731
      %733 = vrot.lane.b32.xlu0 %v272, 56
      %v734 = vpop.permute.xlu0 %733
      %735 = vrot.lane.b32.xlu0 %v273, 56
      %v736 = vpop.permute.xlu0 %735
      %737 = vrot.lane.b32.xlu0 %v274, 56
      %v738 = vpop.permute.xlu0 %737
      %739 = vrot.lane.b32.xlu0 %v275, 56
      %v740 = vpop.permute.xlu0 %739
      %741 = vrot.lane.b32.xlu0 %v276, 56
      %v742 = vpop.permute.xlu0 %741
      %743 = vrot.lane.b32.xlu0 %v277, 56
      %v744 = vpop.permute.xlu0 %743
      %745 = vrot.lane.b32.xlu0 %v278, 56
      %v746 = vpop.permute.xlu0 %745
      %747 = vrot.lane.b32.xlu0 %v279, 56
      %v748 = vpop.permute.xlu0 %747
      %749 = vrot.lane.b32.xlu0 %v280, 56
      %v750 = vpop.permute.xlu0 %749
      %751 = vrot.lane.b32.xlu0 %v281, 56
      %v752 = vpop.permute.xlu0 %751
      %753 = vrot.lane.b32.xlu0 %v282, 56
      %v754 = vpop.permute.xlu0 %753
      %791 = vrot.lane.b32.xlu0 %v283, 64
      %v792 = vpop.permute.xlu0 %791
      %793 = vrot.lane.b32.xlu0 %v284, 64
      %v794 = vpop.permute.xlu0 %793
      %795 = vrot.lane.b32.xlu0 %v285, 64
      %v796 = vpop.permute.xlu0 %795
      %797 = vrot.lane.b32.xlu0 %v286, 64
      %v798 = vpop.permute.xlu0 %797
      %799 = vrot.lane.b32.xlu0 %v287, 64
      %v800 = vpop.permute.xlu0 %799
      %801 = vrot.lane.b32.xlu0 %v288, 64
      %v802 = vpop.permute.xlu0 %801
      %803 = vrot.lane.b32.xlu0 %v289, 64
      %v804 = vpop.permute.xlu0 %803
      %805 = vrot.lane.b32.xlu0 %v290, 64
      %v806 = vpop.permute.xlu0 %805
      %807 = vrot.lane.b32.xlu0 %v291, 64
      %v808 = vpop.permute.xlu0 %807
      %809 = vrot.lane.b32.xlu0 %v292, 64
      %v810 = vpop.permute.xlu0 %809
      %811 = vrot.lane.b32.xlu0 %v293, 64
      %v812 = vpop.permute.xlu0 %811
      %813 = vrot.lane.b32.xlu0 %v294, 64
      %v814 = vpop.permute.xlu0 %813
      %815 = vrot.lane.b32.xlu0 %v295, 64
      %v816 = vpop.permute.xlu0 %815
      %817 = vrot.lane.b32.xlu0 %v296, 64
      %v818 = vpop.permute.xlu0 %817
      %819 = vrot.lane.b32.xlu0 %v297, 64
      %v820 = vpop.permute.xlu0 %819
      %821 = vrot.lane.b32.xlu0 %v298, 64
      %v822 = vpop.permute.xlu0 %821
      %823 = vrot.lane.b32.xlu0 %v299, 64
      %v824 = vpop.permute.xlu0 %823
      %825 = vrot.lane.b32.xlu0 %v300, 64
      %v826 = vpop.permute.xlu0 %825
      %vm845 = vcmask 64512
      %v846 = vsel %vm845, %v171, %v320
      %v847 = vsel %vm845, %v172, %v322
      %v848 = vsel %vm845, %v173, %v324
      %v849 = vsel %vm845, %v174, %v326
      %v850 = vsel %vm845, %v175, %v328
      %v851 = vsel %vm845, %v176, %v330
      %v852 = vsel %vm845, %v177, %v332
      %v853 = vsel %vm845, %v178, %v334
      %v854 = vsel %vm845, %v179, %v336
      %v855 = vsel %vm845, %v180, %v338
      %v856 = vsel %vm845, %v181, %v340
      %v857 = vsel %vm845, %v182, %v342
      %v858 = vsel %vm845, %v183, %v344
      %v859 = vsel %vm845, %v184, %v346
      %v860 = vsel %vm845, %v185, %v348
      %v861 = vsel %vm845, %v186, %v350
      %v862 = vsel %vm845, %v187, %v352
      %v863 = vsel %vm845, %v188, %v354
      %vm864 = vcmask 130048
      %v865 = vsel %vm864, %v846, %v392
      %v866 = vsel %vm864, %v847, %v394
      %v867 = vsel %vm864, %v848, %v396
      %v868 = vsel %vm864, %v849, %v398
      %v869 = vsel %vm864, %v850, %v400
      %v870 = vsel %vm864, %v851, %v402
      %v871 = vsel %vm864, %v852, %v404
      %v872 = vsel %vm864, %v853, %v406
      %v873 = vsel %vm864, %v854, %v408
      %v874 = vsel %vm864, %v855, %v410
      %v875 = vsel %vm864, %v856, %v412
      %v876 = vsel %vm864, %v857, %v414
      %v877 = vsel %vm864, %v858, %v416
      %v878 = vsel %vm864, %v859, %v418
      %v879 = vsel %vm864, %v860, %v420
      %v880 = vsel %vm864, %v861, %v422
      %v881 = vsel %vm864, %v862, %v424
      %v882 = vsel %vm864, %v863, %v426
      %vm883 = vcmask 195584
      %v884 = vsel %vm883, %v865, %v448
      %v885 = vsel %vm883, %v866, %v450
      %v886 = vsel %vm883, %v867, %v452
      %v887 = vsel %vm883, %v868, %v454
      %v888 = vsel %vm883, %v869, %v456
      %v889 = vsel %vm883, %v870, %v458
      %v890 = vsel %vm883, %v871, %v460
      %v891 = vsel %vm883, %v872, %v462
      %v892 = vsel %vm883, %v873, %v464
      %v893 = vsel %vm883, %v874, %v466
      %v894 = vsel %vm883, %v875, %v468
      %v895 = vsel %vm883, %v876, %v470
      %v896 = vsel %vm883, %v877, %v472
      %v897 = vsel %vm883, %v878, %v474
      %v898 = vsel %vm883, %v879, %v476
      %v899 = vsel %vm883, %v880, %v478
      %v900 = vsel %vm883, %v881, %v480
      %v901 = vsel %vm883, %v882, %v482
      %vm902 = vcmask 261120
      %v903 = vsel %vm902, %v884, %v520
      %v904 = vsel %vm902, %v885, %v522
      %v905 = vsel %vm902, %v886, %v524
      %v906 = vsel %vm902, %v887, %v526
      %v907 = vsel %vm902, %v888, %v528
      %v908 = vsel %vm902, %v889, %v530
      %v909 = vsel %vm902, %v890, %v532
      %v910 = vsel %vm902, %v891, %v534
      %v911 = vsel %vm902, %v892, %v536
      %v912 = vsel %vm902, %v893, %v538
      %v913 = vsel %vm902, %v894, %v540
      %v914 = vsel %vm902, %v895, %v542
      %v915 = vsel %vm902, %v896, %v544
      %v916 = vsel %vm902, %v897, %v546
      %v917 = vsel %vm902, %v898, %v548
      %v918 = vsel %vm902, %v899, %v550
      %v919 = vsel %vm902, %v900, %v552
      %v920 = vsel %vm902, %v901, %v554
      %vm921 = vcmask 326656
      %v922 = vsel %vm921, %v903, %v592
      %v923 = vsel %vm921, %v904, %v594
      %v924 = vsel %vm921, %v905, %v596
      %v925 = vsel %vm921, %v906, %v598
      %v926 = vsel %vm921, %v907, %v600
      %v927 = vsel %vm921, %v908, %v602
      %v928 = vsel %vm921, %v909, %v604
      %v929 = vsel %vm921, %v910, %v606
      %v930 = vsel %vm921, %v911, %v608
      %v931 = vsel %vm921, %v912, %v610
      %v932 = vsel %vm921, %v913, %v612
      %v933 = vsel %vm921, %v914, %v614
      %v934 = vsel %vm921, %v915, %v616
      %v935 = vsel %vm921, %v916, %v618
      %v936 = vsel %vm921, %v917, %v620
      %v937 = vsel %vm921, %v918, %v622
      %v938 = vsel %vm921, %v919, %v624
      %v939 = vsel %vm921, %v920, %v626
      %vm940 = vcmask 392192
      %v941 = vsel %vm940, %v922, %v648
      %v942 = vsel %vm940, %v923, %v650
      %v943 = vsel %vm940, %v924, %v652
      %v944 = vsel %vm940, %v925, %v654
      %v945 = vsel %vm940, %v926, %v656
      %v946 = vsel %vm940, %v927, %v658
      %v947 = vsel %vm940, %v928, %v660
      %v948 = vsel %vm940, %v929, %v662
      %v949 = vsel %vm940, %v930, %v664
      %v950 = vsel %vm940, %v931, %v666
      %v951 = vsel %vm940, %v932, %v668
      %v952 = vsel %vm940, %v933, %v670
      %v953 = vsel %vm940, %v934, %v672
      %v954 = vsel %vm940, %v935, %v674
      %v955 = vsel %vm940, %v936, %v676
      %v956 = vsel %vm940, %v937, %v678
      %v957 = vsel %vm940, %v938, %v680
      %v958 = vsel %vm940, %v939, %v682
      %vm959 = vcmask 457728
      %v960 = vsel %vm959, %v941, %v720
      %v961 = vsel %vm959, %v942, %v722
      %v962 = vsel %vm959, %v943, %v724
      %v963 = vsel %vm959, %v944, %v726
      %v964 = vsel %vm959, %v945, %v728
      %v965 = vsel %vm959, %v946, %v730
      %v966 = vsel %vm959, %v947, %v732
      %v967 = vsel %vm959, %v948, %v734
      %v968 = vsel %vm959, %v949, %v736
      %v969 = vsel %vm959, %v950, %v738
      %v970 = vsel %vm959, %v951, %v740
      %v971 = vsel %vm959, %v952, %v742
      %v972 = vsel %vm959, %v953, %v744
      %v973 = vsel %vm959, %v954, %v746
      %v974 = vsel %vm959, %v955, %v748
      %v975 = vsel %vm959, %v956, %v750
      %v976 = vsel %vm959, %v957, %v752
      %v977 = vsel %vm959, %v958, %v754
      %vm978 = vcmask 523264
      %v979 = vsel %vm978, %v960, %v792
      %v980 = vsel %vm978, %v961, %v794
      %v981 = vsel %vm978, %v962, %v796
      %v982 = vsel %vm978, %v963, %v798
      %v983 = vsel %vm978, %v964, %v800
      %v984 = vsel %vm978, %v965, %v802
      %v985 = vsel %vm978, %v966, %v804
      %v986 = vsel %vm978, %v967, %v806
      %v987 = vsel %vm978, %v968, %v808
      %v988 = vsel %vm978, %v969, %v810
      %v989 = vsel %vm978, %v970, %v812
      %v990 = vsel %vm978, %v971, %v814
      %v991 = vsel %vm978, %v972, %v816
      %v992 = vsel %vm978, %v973, %v818
      %v993 = vsel %vm978, %v974, %v820
      %v994 = vsel %vm978, %v975, %v822
      %v995 = vsel %vm978, %v976, %v824
      %v996 = vsel %vm978, %v977, %v826
      %v997 = vld [vmem:[%s1] sm:$0xff]
      %v998 = vld [vmem:[%s1 + $0x8] sm:$0xff]
      %v999 = vld [vmem:[%s1 + $0x10] sm:$0xff]
      %v1000 = vld [vmem:[%s1 + $0x18] sm:$0xff]
      %v1001 = vld [vmem:[%s1 + $0x20] sm:$0xff]
      %v1002 = vld [vmem:[%s1 + $0x28] sm:$0xff]
      %v1003 = vld [vmem:[%s1 + $0x30] sm:$0xff]
      %v1004 = vld [vmem:[%s1 + $0x38] sm:$0xff]
      %v1005 = vld [vmem:[%s1 + $0x40] sm:$0xff]
      %vm1006 = vcmask 588800
      %v1008 = vsel %vm1006, %v979, 0
      %v1011 = vsel %vm1006, %v980, 0
      %v1014 = vsel %vm1006, %v981, 0
      %v1017 = vsel %vm1006, %v982, 0
      %v1020 = vsel %vm1006, %v983, 0
      %v1023 = vsel %vm1006, %v984, 0
      %v1026 = vsel %vm1006, %v985, 0
      %v1029 = vsel %vm1006, %v986, 0
      %v1032 = vsel %vm1006, %v987, 0
      %v1035 = vsel %vm1006, %v988, 0
      %v1038 = vsel %vm1006, %v989, 0
      %v1041 = vsel %vm1006, %v990, 0
      %v1044 = vsel %vm1006, %v991, 0
      %v1047 = vsel %vm1006, %v992, 0
      %v1050 = vsel %vm1006, %v993, 0
      %v1053 = vsel %vm1006, %v994, 0
      %v1056 = vsel %vm1006, %v995, 0
      %v1059 = vsel %vm1006, %v996, 0
      %1061 = vmatpush.msra.mxu0 0.0
      %1062 = vmatpush.msra.mxu0 0.0
      %1063 = vmatpush.msra.mxu0 0.0
      %1064 = vmatpush.msra.mxu0 0.0
      %1065 = vmatpush.msra.mxu0 0.0
      %1066 = vmatpush.msra.mxu0 0.0
      %1067 = vmatpush.msra.mxu0 0.0
      %1068 = vmatpush.msra.mxu0 %v1005
      %1069 = vmatpush.msra.mxu0 %v1004
      %1070 = vmatpush.msra.mxu0 %v1003
      %1071 = vmatpush.msra.mxu0 %v1002
      %1072 = vmatpush.msra.mxu0 %v1001
      %1073 = vmatpush.msra.mxu0 %v1000
      %1074 = vmatpush.msra.mxu0 %v999
      %1075 = vmatpush.msra.mxu0 %v998
      %1076 = vmatpush.msra.mxu0 %v997
      %1077 = vmatmul.f32.gmra.mxu0 %v1008
      %v1078 = vpop.f32.mrf.mxu0
      %v1079 = vadd.f32 0.0, %v1078
      %1080 = vmatmul.f32.gmra.mxu0 %v1011
      %v1081 = vpop.f32.mrf.mxu0
      %v1082 = vadd.f32 0.0, %v1081
      %1083 = vmatmul.f32.gmra.mxu0 %v1014
      %v1084 = vpop.f32.mrf.mxu0
      %v1085 = vadd.f32 0.0, %v1084
      %1086 = vmatmul.f32.gmra.mxu0 %v1017
      %v1087 = vpop.f32.mrf.mxu0
      %v1088 = vadd.f32 0.0, %v1087
      %1089 = vmatmul.f32.gmra.mxu0 %v1020
      %v1090 = vpop.f32.mrf.mxu0
      %v1091 = vadd.f32 0.0, %v1090
      %1092 = vmatmul.f32.gmra.mxu0 %v1023
      %v1093 = vpop.f32.mrf.mxu0
      %v1094 = vadd.f32 0.0, %v1093
      %1095 = vmatmul.f32.gmra.mxu0 %v1026
      %v1096 = vpop.f32.mrf.mxu0
      %v1097 = vadd.f32 0.0, %v1096
      %1098 = vmatmul.f32.gmra.mxu0 %v1029
      %v1099 = vpop.f32.mrf.mxu0
      %v1100 = vadd.f32 0.0, %v1099
      %1101 = vmatmul.f32.gmra.mxu0 %v1032
      %v1102 = vpop.f32.mrf.mxu0
      %v1103 = vadd.f32 0.0, %v1102
      %1104 = vmatmul.f32.gmra.mxu0 %v1035
      %v1105 = vpop.f32.mrf.mxu0
      %v1106 = vadd.f32 0.0, %v1105
      %1107 = vmatmul.f32.gmra.mxu0 %v1038
      %v1108 = vpop.f32.mrf.mxu0
      %v1109 = vadd.f32 0.0, %v1108
      %1110 = vmatmul.f32.gmra.mxu0 %v1041
      %v1111 = vpop.f32.mrf.mxu0
      %v1112 = vadd.f32 0.0, %v1111
      %1113 = vmatmul.f32.gmra.mxu0 %v1044
      %v1114 = vpop.f32.mrf.mxu0
      %v1115 = vadd.f32 0.0, %v1114
      %1116 = vmatmul.f32.gmra.mxu0 %v1047
      %v1117 = vpop.f32.mrf.mxu0
      %v1118 = vadd.f32 0.0, %v1117
      %1119 = vmatmul.f32.gmra.mxu0 %v1050
      %v1120 = vpop.f32.mrf.mxu0
      %v1121 = vadd.f32 0.0, %v1120
      %1122 = vmatmul.f32.gmra.mxu0 %v1053
      %v1123 = vpop.f32.mrf.mxu0
      %v1124 = vadd.f32 0.0, %v1123
      %1125 = vmatmul.f32.gmra.mxu0 %v1056
      %v1126 = vpop.f32.mrf.mxu0
      %v1127 = vadd.f32 0.0, %v1126
      %1128 = vmatmul.f32.gmra.mxu0 %v1059
      %v1129 = vpop.f32.mrf.mxu0
      %v1130 = vadd.f32 0.0, %v1129
      %1131 = vdwg.mxu0
      %v1132 = vld [vmem:[%s2] sm:$0x1]
      %v1133 = vld [vmem:[%s2 + $0x1] sm:$0x1]
      %v1134 = vperm.slane %v1132, 0
      %v1135 = vmul.f32 %v1079, %v1134
      %v1136 = vmul.f32 %v1082, %v1134
      %v1137 = vmul.f32 %v1085, %v1134
      %v1138 = vmul.f32 %v1088, %v1134
      %v1139 = vmul.f32 %v1091, %v1134
      %v1140 = vmul.f32 %v1094, %v1134
      %v1141 = vmul.f32 %v1097, %v1134
      %v1142 = vmul.f32 %v1100, %v1134
      %v1143 = vmul.f32 %v1103, %v1134
      %v1144 = vmul.f32 %v1106, %v1134
      %v1145 = vmul.f32 %v1109, %v1134
      %v1146 = vmul.f32 %v1112, %v1134
      %v1147 = vmul.f32 %v1115, %v1134
      %v1148 = vmul.f32 %v1118, %v1134
      %v1149 = vmul.f32 %v1121, %v1134
      %v1150 = vmul.f32 %v1124, %v1134
      %v1151 = vmul.f32 %v1127, %v1134
      %v1152 = vmul.f32 %v1130, %v1134
      %v1153 = vperm.slane %v1133, 0
      %v1154 = vadd.f32 %v1135, %v1153
      %v1155 = vadd.f32 %v1136, %v1153
      %v1156 = vadd.f32 %v1137, %v1153
      %v1157 = vadd.f32 %v1138, %v1153
      %v1158 = vadd.f32 %v1139, %v1153
      %v1159 = vadd.f32 %v1140, %v1153
      %v1160 = vadd.f32 %v1141, %v1153
      %v1161 = vadd.f32 %v1142, %v1153
      %v1162 = vadd.f32 %v1143, %v1153
      %v1163 = vadd.f32 %v1144, %v1153
      %v1164 = vadd.f32 %v1145, %v1153
      %v1165 = vadd.f32 %v1146, %v1153
      %v1166 = vadd.f32 %v1147, %v1153
      %v1167 = vadd.f32 %v1148, %v1153
      %v1168 = vadd.f32 %v1149, %v1153
      %v1169 = vadd.f32 %v1150, %v1153
      %v1170 = vadd.f32 %v1151, %v1153
      %v1171 = vadd.f32 %v1152, %v1153
      %v1172 = vmax.f32 %v1154, 0.0
      %v1173 = vmax.f32 %v1155, 0.0
      %v1174 = vmax.f32 %v1156, 0.0
      %v1175 = vmax.f32 %v1157, 0.0
      %v1176 = vmax.f32 %v1158, 0.0
      %v1177 = vmax.f32 %v1159, 0.0
      %v1178 = vmax.f32 %v1160, 0.0
      %v1179 = vmax.f32 %v1161, 0.0
      %v1180 = vmax.f32 %v1162, 0.0
      %v1181 = vmax.f32 %v1163, 0.0
      %v1182 = vmax.f32 %v1164, 0.0
      %v1183 = vmax.f32 %v1165, 0.0
      %v1184 = vmax.f32 %v1166, 0.0
      %v1185 = vmax.f32 %v1167, 0.0
      %v1186 = vmax.f32 %v1168, 0.0
      %v1187 = vmax.f32 %v1169, 0.0
      %v1188 = vmax.f32 %v1170, 0.0
      %v1189 = vmax.f32 %v1171, 0.0
      %1190 = vst.msk [vmem:[%s170] sm:$0xff] %vm845, %v1172
      %1191 = vst.msk [vmem:[%s170 + $0x8] sm:$0xff] %vm845, %v1173
      %1192 = vst.msk [vmem:[%s170 + $0x10] sm:$0xff] %vm845, %v1174
      %1193 = vst.msk [vmem:[%s170 + $0x18] sm:$0xff] %vm845, %v1175
      %1194 = vst.msk [vmem:[%s170 + $0x20] sm:$0xff] %vm845, %v1176
      %1195 = vst.msk [vmem:[%s170 + $0x28] sm:$0xff] %vm845, %v1177
      %1196 = vst.msk [vmem:[%s170 + $0x30] sm:$0xff] %vm845, %v1178
      %1197 = vst.msk [vmem:[%s170 + $0x38] sm:$0xff] %vm845, %v1179
      %1198 = vst.msk [vmem:[%s170 + $0x40] sm:$0xff] %vm845, %v1180
      %1199 = vst.msk [vmem:[%s170 + $0x48] sm:$0xff] %vm845, %v1181
      %1200 = vst.msk [vmem:[%s170 + $0x50] sm:$0xff] %vm845, %v1182
      %1201 = vst.msk [vmem:[%s170 + $0x58] sm:$0xff] %vm845, %v1183
      %1202 = vst.msk [vmem:[%s170 + $0x60] sm:$0xff] %vm845, %v1184
      %1203 = vst.msk [vmem:[%s170 + $0x68] sm:$0xff] %vm845, %v1185
      %1204 = vst.msk [vmem:[%s170 + $0x70] sm:$0xff] %vm845, %v1186
      %1205 = vst.msk [vmem:[%s170 + $0x78] sm:$0xff] %vm845, %v1187
      %1206 = vst.msk [vmem:[%s170 + $0x80] sm:$0xff] %vm845, %v1188
      %1207 = vst.msk [vmem:[%s170 + $0x88] sm:$0xff] %vm845, %v1189
      %p1208 = scmp.lt.s32.totalorder %s14, 3
      %s1209 = scalar_select %p1208, %s14, 3
      %s1210 = smul.addr %s1209, 18
      %s1211 = smul.addr %s1210, 8
      %s1212 = scalar_lea.vmem %s3, %s1211
      // Predicated region
      $region33: #{conv_block_forward.3} parent=31 // pred_check
        %p1213 = pneg %p100
      $region34: #{conv_block_forward.3} parent=31 // pred_check_branch
        %1215 = sbr.rel (%p1213) target = $region36
      $region35: #{conv_block_forward.3} parent=31 // pred_region
        _
      $region36: #{conv_block_forward.3} parent=31 // pred_fallthru
        _
    $region32: #{conv_block_forward.3} parent=5 // pred_fallthru
      _
    %p1216 = scmp.le.s32.totalorder 2, %s9
    // Predicated region
    $region37: #{conv_block_forward.3} parent=5 // pred_check
      %p1217 = pneg %p1216
    $region38: #{conv_block_forward.3} parent=5 // pred_check_branch
      %1219 = sbr.rel (%p1217) target = $region40
    $region39: #{conv_block_forward.3} parent=5 // pred_region
      %s1220 = ssub.s32 %s9, 2
      // Predicated region
      $region41: #{conv_block_forward.3} parent=39 // pred_check
        %p1221 = pneg %p106
      $region42: #{conv_block_forward.3} parent=39 // pred_check_branch
        %1223 = sbr.rel (%p1221) target = $region44
      $region43: #{conv_block_forward.3} parent=39 // pred_region
        %p1224 = scmp.lt.s32.totalorder %s15, 3
        %s1225 = scalar_select %p1224, %s15, 3
        %s1226 = smul.addr %s1225, 18
        %s1227 = smul.addr %s1226, 8
        %s1228 = scalar_lea.vmem %s3, %s1227
      $region44: #{conv_block_forward.3} parent=39 // pred_fallthru
        _
    $region40: #{conv_block_forward.3} parent=5 // pred_fallthru
      _
  $region6: #{conv_block_forward.3} parent=0 // loop_footer
    %s13 = sadd.s32 1, %s9
  $region7: #{conv_block_forward.3} parent=0 // loop_footer_branch
    %8 = sbr.rel target = $region3
  $region8: #{conv_block_forward.3} parent=0 // loop_exit
    _

// kernel: conv_block_forward.2
$region0: #{conv_block_forward.2}
  #allocation0 [shape = 'u32[]', space=smem, size = 0x4, offset = 0x4, fixed_abs, tag = 'smem constant byte address 0x4 - core index']
  #allocation1 [shape = 'u32[72,128]{1,0:T(1,128)}', space=vmem, size = 0x9000, scoped, tag = 'internal scratch']
  %s0 = inlined_call_operand.vmem [shape: f32[4,182,8], index: 0, kind: input, shape index: {}]
  %s1 = inlined_call_operand.vmem [shape: f32[72,128], index: 1, kind: input, shape index: {}]
  %s2 = inlined_call_operand.vmem [shape: f32[144,1], index: 2, kind: input, shape index: {}]
  %s3 = inlined_call_operand.vmem [shape: f32[4,2,128], index: 3, kind: output, shape index: {}]
  %s4 = sld [smem:[#allocation0]]
  $region45: #{conv_block_forward.2} parent=0
    _
  %s6 = ssub.s32 1, %s4
  %s7 = scalar_select 0, %s6, %s4
  loop: start=0, step=1, limit=6
  $region2: #{conv_block_forward.2} parent=0 // loop_pre_header
    _
  $region3: #{conv_block_forward.2} parent=0 // loop_header
    %s9 = sphi 0, %s13
    %p10 = scmp.ge.s32.totalorder %s9, 6
    %s19 = sphi 0, %s21
    %s22 = sphi 0, %s19
    %s23 = sphi 0, %s22
    %s39 = sphi 0, %s23
    %s43 = sphi 0, %s43
    %s45 = sphi 0, %s43
    %s46 = sphi 0, %s45
    %s60 = sphi 0, %s46
    %s64 = sphi 0, %s64
    %s66 = sphi 0, %s64
    %s67 = sphi 0, %s66
    %s81 = sphi 0, %s67
    %s87 = sphi 0, %s89
    %s90 = sphi 0, %s87
    %s91 = sphi 0, %s90
    %s107 = sphi 0, %s91
  $region4: #{conv_block_forward.2} parent=0 // loop_header_branch
    %12 = sbr.rel (%p10) target = $region8
  $region5: #{conv_block_forward.2} parent=0 // loop_body
    %s14 = ssub.s32 %s9, 1
    %s15 = ssub.s32 %s9, 2
    %s16 = sadd.s32 %s9, 1
    %s17 = ssub.s32 %s9, %s16
    %p18 = scmp.eq.s32.totalorder %s17, 0
    %s20 = sadd.s32 %s19, 1
    %s21 = scalar_select %p18, %s19, %s20
    %p24 = pneg %p18
    %p25 = scmp.eq.s32.totalorder %s9, 3
    %p26 = por %p24, %p25
    %p27 = scmp.ne.s32.totalorder %s19, %s22
    %p28 = scmp.eq.s32.totalorder %s9, 0
    %p29 = por %p27, %p28
    %p30 = scmp.ne.s32.totalorder %s19, %s22
    %p31 = scmp.eq.s32.totalorder %s14, 3
    %p32 = por %p30, %p31
    %p33 = scmp.ne.s32.totalorder %s22, %s23
    %p34 = scmp.eq.s32.totalorder %s14, 0
    %p35 = por %p33, %p34
    %p36 = scmp.ne.s32.totalorder %s22, %s23
    %p37 = scmp.eq.s32.totalorder %s15, 3
    %p38 = por %p36, %p37
    %p40 = scmp.ne.s32.totalorder %s23, %s39
    %p41 = scmp.eq.s32.totalorder %s15, 0
    %p42 = por %p40, %p41
    %s44 = sadd.s32 %s43, 1
    %p47 = scmp.eq.s32.totalorder %s9, 3
    %p48 = scmp.ne.s32.totalorder %s43, %s45
    %p49 = scmp.eq.s32.totalorder %s9, 0
    %p50 = por %p48, %p49
    %p51 = scmp.ne.s32.totalorder %s43, %s45
    %p52 = scmp.eq.s32.totalorder %s14, 3
    %p53 = por %p51, %p52
    %p54 = scmp.ne.s32.totalorder %s45, %s46
    %p55 = scmp.eq.s32.totalorder %s14, 0
    %p56 = por %p54, %p55
    %p57 = scmp.ne.s32.totalorder %s45, %s46
    %p58 = scmp.eq.s32.totalorder %s15, 3
    %p59 = por %p57, %p58
    %p61 = scmp.ne.s32.totalorder %s46, %s60
    %p62 = scmp.eq.s32.totalorder %s15, 0
    %p63 = por %p61, %p62
    %s65 = sadd.s32 %s64, 1
    %p68 = scmp.eq.s32.totalorder %s9, 3
    %p69 = scmp.ne.s32.totalorder %s64, %s66
    %p70 = scmp.eq.s32.totalorder %s9, 0
    %p71 = por %p69, %p70
    %p72 = scmp.ne.s32.totalorder %s64, %s66
    %p73 = scmp.eq.s32.totalorder %s14, 3
    %p74 = por %p72, %p73
    %p75 = scmp.ne.s32.totalorder %s66, %s67
    %p76 = scmp.eq.s32.totalorder %s14, 0
    %p77 = por %p75, %p76
    %p78 = scmp.ne.s32.totalorder %s66, %s67
    %p79 = scmp.eq.s32.totalorder %s15, 3
    %p80 = por %p78, %p79
    %p82 = scmp.ne.s32.totalorder %s67, %s81
    %p83 = scmp.eq.s32.totalorder %s15, 0
    %p84 = por %p82, %p83
    %s85 = ssub.s32 %s9, %s16
    %p86 = scmp.eq.s32.totalorder %s85, 0
    %s88 = sadd.s32 %s87, 1
    %s89 = scalar_select %p86, %s87, %s88
    %p92 = pneg %p86
    %p93 = scmp.eq.s32.totalorder %s9, 3
    %p94 = por %p92, %p93
    %p95 = scmp.ne.s32.totalorder %s87, %s90
    %p96 = scmp.eq.s32.totalorder %s9, 0
    %p97 = por %p95, %p96
    %p98 = scmp.ne.s32.totalorder %s87, %s90
    %p99 = scmp.eq.s32.totalorder %s14, 3
    %p100 = por %p98, %p99
    %p101 = scmp.ne.s32.totalorder %s90, %s91
    %p102 = scmp.eq.s32.totalorder %s14, 0
    %p103 = por %p101, %p102
    %p104 = scmp.ne.s32.totalorder %s90, %s91
    %p105 = scmp.eq.s32.totalorder %s15, 3
    %p106 = por %p104, %p105
    %p108 = scmp.ne.s32.totalorder %s91, %s107
    %p109 = scmp.eq.s32.totalorder %s15, 0
    %p110 = por %p108, %p109
    %p111 = scmp.le.s32.totalorder 1, %s9
    %p112 = scmp.lt.s32.totalorder %s9, 5
    %p113 = pnand %p111, %p112
    %p114 = pneg %p113
    // Predicated region
    $region9: #{conv_block_forward.2} parent=5 // pred_check
      _
    $region10: #{conv_block_forward.2} parent=5 // pred_check_branch
      %116 = sbr.rel (%p113) target = $region12
    $region11: #{conv_block_forward.2} parent=5 // pred_region
      %s117 = ssub.s32 %s9, 1
      // Predicated region
      $region13: #{conv_block_forward.2} parent=11 // pred_check
        %p118 = pneg %p56
      $region14: #{conv_block_forward.2} parent=11 // pred_check_branch
        %120 = sbr.rel (%p118) target = $region16
      $region15: #{conv_block_forward.2} parent=11 // pred_region
        _
      $region16: #{conv_block_forward.2} parent=11 // pred_fallthru
        _
      // Predicated region
      $region17: #{conv_block_forward.2} parent=11 // pred_check
        %p121 = pneg %p77
      $region18: #{conv_block_forward.2} parent=11 // pred_check_branch
        %123 = sbr.rel (%p121) target = $region20
      $region19: #{conv_block_forward.2} parent=11 // pred_region
        _
      $region20: #{conv_block_forward.2} parent=11 // pred_fallthru
        _
    $region12: #{conv_block_forward.2} parent=5 // pred_fallthru
      _
    %p124 = scmp.lt.s32.totalorder %s9, 4
    // Predicated region
    $region21: #{conv_block_forward.2} parent=5 // pred_check
      %p125 = pneg %p124
    $region22: #{conv_block_forward.2} parent=5 // pred_check_branch
      %127 = sbr.rel (%p125) target = $region24
    $region23: #{conv_block_forward.2} parent=5 // pred_region
      // Predicated region
      $region25: #{conv_block_forward.2} parent=23 // pred_check
        %p128 = pneg %p29
      $region26: #{conv_block_forward.2} parent=23 // pred_check_branch
        %130 = sbr.rel (%p128) target = $region28
      $region27: #{conv_block_forward.2} parent=23 // pred_region
        %p131 = scmp.lt.s32.totalorder %s9, 3
        %s132 = scalar_select %p131, %s9, 3
        %s133 = smul.addr %s132, 23
        %s134 = smul.addr %s133, 8
        %s135 = scalar_lea.vmem %s0, %s134
      $region28: #{conv_block_forward.2} parent=23 // pred_fallthru
        _
    $region24: #{conv_block_forward.2} parent=5 // pred_fallthru
      _
    %p136 = scmp.le.s32.totalorder 1, %s9
    %p137 = scmp.lt.s32.totalorder %s9, 5
    %p138 = pnand %p136, %p137
    %p139 = pneg %p138
    // Predicated region
    $region29: #{conv_block_forward.2} parent=5 // pred_check
      _
    $region30: #{conv_block_forward.2} parent=5 // pred_check_branch
      %141 = sbr.rel (%p138) target = $region32
    $region31: #{conv_block_forward.2} parent=5 // pred_region
      %s142 = ssub.s32 %s9, 1
      %p143 = scmp.lt.s32.totalorder %s14, 3
      %s144 = scalar_select %p143, %s14, 3
      %s145 = smul.addr %s144, 23
      %s146 = smul.addr %s145, 8
      %s147 = scalar_lea.vmem %s0, %s146
      %p148 = pneg %p35
      %p149 = pneg %p32
      %p150 = pneg %p56
      %p151 = pneg %p53
      %p152 = pneg %p77
      %p153 = pneg %p74
      %p154 = pneg %p103
      %p155 = pneg %p100
      %p156 = scmp.lt.s32.totalorder %s14, 3
      %s157 = scalar_select %p156, %s14, 3
      %s158 = smul.addr %s157, 2
      %s159 = scalar_lea.vmem %s3, %s158
      %p160 = scmp.lt.s32.totalorder %s14, 3
      %s161 = scalar_select %p160, %s14, 3
      %s162 = smul.addr %s161, 23
      %s163 = smul.addr %s162, 8
      %s164 = scalar_lea.vmem %s0, %s163
      %p165 = scmp.lt.s32.totalorder %s14, 3
      %s166 = scalar_select %p165, %s14, 3
      %s167 = smul.addr %s166, 2
      %s168 = scalar_lea.vmem %s3, %s167
      %v169 = vld [vmem:[%s164] sm:$0xff]
      %v170 = vld [vmem:[%s164 + $0x8] sm:$0xff]
      %v171 = vld [vmem:[%s164 + $0x10] sm:$0xff]
      %v172 = vld [vmem:[%s164 + $0x18] sm:$0xff]
      %v173 = vld [vmem:[%s164 + $0x20] sm:$0xff]
      %v174 = vld [vmem:[%s164 + $0x28] sm:$0xff]
      %v175 = vld [vmem:[%s164 + $0x30] sm:$0xff]
      %v176 = vld [vmem:[%s164 + $0x38] sm:$0xff]
      %v177 = vld [vmem:[%s164 + $0x40] sm:$0xff]
      %v178 = vld [vmem:[%s164 + $0x48] sm:$0xff]
      %v179 = vld [vmem:[%s164 + $0x50] sm:$0xff]
      %v180 = vld [vmem:[%s164 + $0x58] sm:$0xff]
      %v181 = vld [vmem:[%s164 + $0x60] sm:$0xff]
      %v182 = vld [vmem:[%s164 + $0x68] sm:$0xff]
      %v183 = vld [vmem:[%s164 + $0x70] sm:$0xff]
      %v184 = vld [vmem:[%s164 + $0x78] sm:$0xff]
      %v185 = vld [vmem:[%s164 + $0x80] sm:$0xff]
      %v186 = vld [vmem:[%s164 + $0x88] sm:$0xff]
      %v187 = vld [vmem:[%s164 + $0x1] sm:$0xff]
      %v188 = vld [vmem:[%s164 + $0x9] sm:$0xff]
      %v189 = vld [vmem:[%s164 + $0x11] sm:$0xff]
      %v190 = vld [vmem:[%s164 + $0x19] sm:$0xff]
      %v191 = vld [vmem:[%s164 + $0x21] sm:$0xff]
      %v192 = vld [vmem:[%s164 + $0x29] sm:$0xff]
      %v193 = vld [vmem:[%s164 + $0x31] sm:$0xff]
      %v194 = vld [vmem:[%s164 + $0x39] sm:$0xff]
      %v195 = vld [vmem:[%s164 + $0x41] sm:$0xff]
      %v196 = vld [vmem:[%s164 + $0x49] sm:$0xff]
      %v197 = vld [vmem:[%s164 + $0x51] sm:$0xff]
      %v198 = vld [vmem:[%s164 + $0x59] sm:$0xff]
      %v199 = vld [vmem:[%s164 + $0x61] sm:$0xff]
      %v200 = vld [vmem:[%s164 + $0x69] sm:$0xff]
      %v201 = vld [vmem:[%s164 + $0x71] sm:$0xff]
      %v202 = vld [vmem:[%s164 + $0x79] sm:$0xff]
      %v203 = vld [vmem:[%s164 + $0x81] sm:$0xff]
      %v204 = vld [vmem:[%s164 + $0x89] sm:$0xff]
      %v205 = vld [vmem:[%s164 + $0x2] sm:$0xff]
      %v206 = vld [vmem:[%s164 + $0xa] sm:$0xff]
      %v207 = vld [vmem:[%s164 + $0x12] sm:$0xff]
      %v208 = vld [vmem:[%s164 + $0x1a] sm:$0xff]
      %v209 = vld [vmem:[%s164 + $0x22] sm:$0xff]
      %v210 = vld [vmem:[%s164 + $0x2a] sm:$0xff]
      %v211 = vld [vmem:[%s164 + $0x32] sm:$0xff]
      %v212 = vld [vmem:[%s164 + $0x3a] sm:$0xff]
      %v213 = vld [vmem:[%s164 + $0x42] sm:$0xff]
      %v214 = vld [vmem:[%s164 + $0x4a] sm:$0xff]
      %v215 = vld [vmem:[%s164 + $0x52] sm:$0xff]
      %v216 = vld [vmem:[%s164 + $0x5a] sm:$0xff]
      %v217 = vld [vmem:[%s164 + $0x62] sm:$0xff]
      %v218 = vld [vmem:[%s164 + $0x6a] sm:$0xff]
      %v219 = vld [vmem:[%s164 + $0x72] sm:$0xff]
      %v220 = vld [vmem:[%s164 + $0x7a] sm:$0xff]
      %v221 = vld [vmem:[%s164 + $0x82] sm:$0xff]
      %v222 = vld [vmem:[%s164 + $0x8a] sm:$0xff]
      %v223 = vld [vmem:[%s164 + $0x92] sm:$0xff]
      %v224 = vld [vmem:[%s164 + $0x9a] sm:$0xff]
      %v225 = vld [vmem:[%s164 + $0x13] sm:$0xff]
      %v226 = vld [vmem:[%s164 + $0x1b] sm:$0xff]
      %v227 = vld [vmem:[%s164 + $0x23] sm:$0xff]
      %v228 = vld [vmem:[%s164 + $0x2b] sm:$0xff]
      %v229 = vld [vmem:[%s164 + $0x33] sm:$0xff]
      %v230 = vld [vmem:[%s164 + $0x3b] sm:$0xff]
      %v231 = vld [vmem:[%s164 + $0x43] sm:$0xff]
      %v232 = vld [vmem:[%s164 + $0x4b] sm:$0xff]
      %v233 = vld [vmem:[%s164 + $0x53] sm:$0xff]
      %v234 = vld [vmem:[%s164 + $0x5b] sm:$0xff]
      %v235 = vld [vmem:[%s164 + $0x63] sm:$0xff]
      %v236 = vld [vmem:[%s164 + $0x6b] sm:$0xff]
      %v237 = vld [vmem:[%s164 + $0x73] sm:$0xff]
      %v238 = vld [vmem:[%s164 + $0x7b] sm:$0xff]
      %v239 = vld [vmem:[%s164 + $0x83] sm:$0xff]
      %v240 = vld [vmem:[%s164 + $0x8b] sm:$0xff]
      %v241 = vld [vmem:[%s164 + $0x93] sm:$0xff]
      %v242 = vld [vmem:[%s164 + $0x9b] sm:$0xff]
      %v243 = vld [vmem:[%s164 + $0x14] sm:$0xff]
      %v244 = vld [vmem:[%s164 + $0x1c] sm:$0xff]
      %v245 = vld [vmem:[%s164 + $0x24] sm:$0xff]
      %v246 = vld [vmem:[%s164 + $0x2c] sm:$0xff]
      %v247 = vld [vmem:[%s164 + $0x34] sm:$0xff]
      %v248 = vld [vmem:[%s164 + $0x3c] sm:$0xff]
      %v249 = vld [vmem:[%s164 + $0x44] sm:$0xff]
      %v250 = vld [vmem:[%s164 + $0x4c] sm:$0xff]
      %v251 = vld [vmem:[%s164 + $0x54] sm:$0xff]
      %v252 = vld [vmem:[%s164 + $0x5c] sm:$0xff]
      %v253 = vld [vmem:[%s164 + $0x64] sm:$0xff]
      %v254 = vld [vmem:[%s164 + $0x6c] sm:$0xff]
      %v255 = vld [vmem:[%s164 + $0x74] sm:$0xff]
      %v256 = vld [vmem:[%s164 + $0x7c] sm:$0xff]
      %v257 = vld [vmem:[%s164 + $0x84] sm:$0xff]
      %v258 = vld [vmem:[%s164 + $0x8c] sm:$0xff]
      %v259 = vld [vmem:[%s164 + $0x94] sm:$0xff]
      %v260 = vld [vmem:[%s164 + $0x9c] sm:$0xff]
      %v261 = vld [vmem:[%s164 + $0xa4] sm:$0xff]
      %v262 = vld [vmem:[%s164 + $0xac] sm:$0xff]
      %v263 = vld [vmem:[%s164 + $0x25] sm:$0xff]
      %v264 = vld [vmem:[%s164 + $0x2d] sm:$0xff]
      %v265 = vld [vmem:[%s164 + $0x35] sm:$0xff]
      %v266 = vld [vmem:[%s164 + $0x3d] sm:$0xff]
      %v267 = vld [vmem:[%s164 + $0x45] sm:$0xff]
      %v268 = vld [vmem:[%s164 + $0x4d] sm:$0xff]
      %v269 = vld [vmem:[%s164 + $0x55] sm:$0xff]
      %v270 = vld [vmem:[%s164 + $0x5d] sm:$0xff]
      %v271 = vld [vmem:[%s164 + $0x65] sm:$0xff]
      %v272 = vld [vmem:[%s164 + $0x6d] sm:$0xff]
      %v273 = vld [vmem:[%s164 + $0x75] sm:$0xff]
      %v274 = vld [vmem:[%s164 + $0x7d] sm:$0xff]
      %v275 = vld [vmem:[%s164 + $0x85] sm:$0xff]
      %v276 = vld [vmem:[%s164 + $0x8d] sm:$0xff]
      %v277 = vld [vmem:[%s164 + $0x95] sm:$0xff]
      %v278 = vld [vmem:[%s164 + $0x9d] sm:$0xff]
      %v279 = vld [vmem:[%s164 + $0xa5] sm:$0xff]
      %v280 = vld [vmem:[%s164 + $0xad] sm:$0xff]
      %v281 = vld [vmem:[%s164 + $0x26] sm:$0xff]
      %v282 = vld [vmem:[%s164 + $0x2e] sm:$0xff]
      %v283 = vld [vmem:[%s164 + $0x36] sm:$0xff]
      %v284 = vld [vmem:[%s164 + $0x3e] sm:$0xff]
      %v285 = vld [vmem:[%s164 + $0x46] sm:$0xff]
      %v286 = vld [vmem:[%s164 + $0x4e] sm:$0xff]
      %v287 = vld [vmem:[%s164 + $0x56] sm:$0xff]
      %v288 = vld [vmem:[%s164 + $0x5e] sm:$0xff]
      %v289 = vld [vmem:[%s164 + $0x66] sm:$0xff]
      %v290 = vld [vmem:[%s164 + $0x6e] sm:$0xff]
      %v291 = vld [vmem:[%s164 + $0x76] sm:$0xff]
      %v292 = vld [vmem:[%s164 + $0x7e] sm:$0xff]
      %v293 = vld [vmem:[%s164 + $0x86] sm:$0xff]
      %v294 = vld [vmem:[%s164 + $0x8e] sm:$0xff]
      %v295 = vld [vmem:[%s164 + $0x96] sm:$0xff]
      %v296 = vld [vmem:[%s164 + $0x9e] sm:$0xff]
      %v297 = vld [vmem:[%s164 + $0xa6] sm:$0xff]
      %v298 = vld [vmem:[%s164 + $0xae] sm:$0xff]
      %317 = vrot.lane.b32.xlu0 %v187, 8
      %v318 = vpop.permute.xlu0 %317
      %319 = vrot.lane.b32.xlu0 %v188, 8
      %v320 = vpop.permute.xlu0 %319
      %321 = vrot.lane.b32.xlu0 %v189, 8
      %v322 = vpop.permute.xlu0 %321
      %323 = vrot.lane.b32.xlu0 %v190, 8
      %v324 = vpop.permute.xlu0 %323
      %325 = vrot.lane.b32.xlu0 %v191, 8
      %v326 = vpop.permute.xlu0 %325
      %327 = vrot.lane.b32.xlu0 %v192, 8
      %v328 = vpop.permute.xlu0 %327
      %329 = vrot.lane.b32.xlu0 %v193, 8
      %v330 = vpop.permute.xlu0 %329
      %331 = vrot.lane.b32.xlu0 %v194, 8
      %v332 = vpop.permute.xlu0 %331
      %333 = vrot.lane.b32.xlu0 %v195, 8
      %v334 = vpop.permute.xlu0 %333
      %335 = vrot.lane.b32.xlu0 %v196, 8
      %v336 = vpop.permute.xlu0 %335
      %337 = vrot.lane.b32.xlu0 %v197, 8
      %v338 = vpop.permute.xlu0 %337
      %339 = vrot.lane.b32.xlu0 %v198, 8
      %v340 = vpop.permute.xlu0 %339
      %341 = vrot.lane.b32.xlu0 %v199, 8
      %v342 = vpop.permute.xlu0 %341
      %343 = vrot.lane.b32.xlu0 %v200, 8
      %v344 = vpop.permute.xlu0 %343
      %345 = vrot.lane.b32.xlu0 %v201, 8
      %v346 = vpop.permute.xlu0 %345
      %347 = vrot.lane.b32.xlu0 %v202, 8
      %v348 = vpop.permute.xlu0 %347
      %349 = vrot.lane.b32.xlu0 %v203, 8
      %v350 = vpop.permute.xlu0 %349
      %351 = vrot.lane.b32.xlu0 %v204, 8
      %v352 = vpop.permute.xlu0 %351
      %389 = vrot.lane.b32.xlu0 %v205, 16
      %v390 = vpop.permute.xlu0 %389
      %391 = vrot.lane.b32.xlu0 %v206, 16
      %v392 = vpop.permute.xlu0 %391
      %393 = vrot.lane.b32.xlu0 %v207, 16
      %v394 = vpop.permute.xlu0 %393
      %395 = vrot.lane.b32.xlu0 %v208, 16
      %v396 = vpop.permute.xlu0 %395
      %397 = vrot.lane.b32.xlu0 %v209, 16
      %v398 = vpop.permute.xlu0 %397
      %399 = vrot.lane.b32.xlu0 %v210, 16
      %v400 = vpop.permute.xlu0 %399
      %401 = vrot.lane.b32.xlu0 %v211, 16
      %v402 = vpop.permute.xlu0 %401
      %403 = vrot.lane.b32.xlu0 %v212, 16
      %v404 = vpop.permute.xlu0 %403
      %405 = vrot.lane.b32.xlu0 %v213, 16
      %v406 = vpop.permute.xlu0 %405
      %407 = vrot.lane.b32.xlu0 %v214, 16
      %v408 = vpop.permute.xlu0 %407
      %409 = vrot.lane.b32.xlu0 %v215, 16
      %v410 = vpop.permute.xlu0 %409
      %411 = vrot.lane.b32.xlu0 %v216, 16
      %v412 = vpop.permute.xlu0 %411
      %413 = vrot.lane.b32.xlu0 %v217, 16
      %v414 = vpop.permute.xlu0 %413
      %415 = vrot.lane.b32.xlu0 %v218, 16
      %v416 = vpop.permute.xlu0 %415
      %417 = vrot.lane.b32.xlu0 %v219, 16
      %v418 = vpop.permute.xlu0 %417
      %419 = vrot.lane.b32.xlu0 %v220, 16
      %v420 = vpop.permute.xlu0 %419
      %421 = vrot.lane.b32.xlu0 %v221, 16
      %v422 = vpop.permute.xlu0 %421
      %423 = vrot.lane.b32.xlu0 %v222, 16
      %v424 = vpop.permute.xlu0 %423
      %445 = vrot.lane.b32.xlu0 %v207, 24
      %v446 = vpop.permute.xlu0 %445
      %447 = vrot.lane.b32.xlu0 %v208, 24
      %v448 = vpop.permute.xlu0 %447
      %449 = vrot.lane.b32.xlu0 %v209, 24
      %v450 = vpop.permute.xlu0 %449
      %451 = vrot.lane.b32.xlu0 %v210, 24
      %v452 = vpop.permute.xlu0 %451
      %453 = vrot.lane.b32.xlu0 %v211, 24
      %v454 = vpop.permute.xlu0 %453
      %455 = vrot.lane.b32.xlu0 %v212, 24
      %v456 = vpop.permute.xlu0 %455
      %457 = vrot.lane.b32.xlu0 %v213, 24
      %v458 = vpop.permute.xlu0 %457
      %459 = vrot.lane.b32.xlu0 %v214, 24
      %v460 = vpop.permute.xlu0 %459
      %461 = vrot.lane.b32.xlu0 %v215, 24
      %v462 = vpop.permute.xlu0 %461
      %463 = vrot.lane.b32.xlu0 %v216, 24
      %v464 = vpop.permute.xlu0 %463
      %465 = vrot.lane.b32.xlu0 %v217, 24
      %v466 = vpop.permute.xlu0 %465
      %467 = vrot.lane.b32.xlu0 %v218, 24
      %v468 = vpop.permute.xlu0 %467
      %469 = vrot.lane.b32.xlu0 %v219, 24
      %v470 = vpop.permute.xlu0 %469
      %471 = vrot.lane.b32.xlu0 %v220, 24
      %v472 = vpop.permute.xlu0 %471
      %473 = vrot.lane.b32.xlu0 %v221, 24
      %v474 = vpop.permute.xlu0 %473
      %475 = vrot.lane.b32.xlu0 %v222, 24
      %v476 = vpop.permute.xlu0 %475
      %477 = vrot.lane.b32.xlu0 %v223, 24
      %v478 = vpop.permute.xlu0 %477
      %479 = vrot.lane.b32.xlu0 %v224, 24
      %v480 = vpop.permute.xlu0 %479
      %517 = vrot.lane.b32.xlu0 %v225, 32
      %v518 = vpop.permute.xlu0 %517
      %519 = vrot.lane.b32.xlu0 %v226, 32
      %v520 = vpop.permute.xlu0 %519
      %521 = vrot.lane.b32.xlu0 %v227, 32
      %v522 = vpop.permute.xlu0 %521
      %523 = vrot.lane.b32.xlu0 %v228, 32
      %v524 = vpop.permute.xlu0 %523
      %525 = vrot.lane.b32.xlu0 %v229, 32
      %v526 = vpop.permute.xlu0 %525
      %527 = vrot.lane.b32.xlu0 %v230, 32
      %v528 = vpop.permute.xlu0 %527
      %529 = vrot.lane.b32.xlu0 %v231, 32
      %v530 = vpop.permute.xlu0 %529
      %531 = vrot.lane.b32.xlu0 %v232, 32
      %v532 = vpop.permute.xlu0 %531
      %533 = vrot.lane.b32.xlu0 %v233, 32
      %v534 = vpop.permute.xlu0 %533
      %535 = vrot.lane.b32.xlu0 %v234, 32
      %v536 = vpop.permute.xlu0 %535
      %537 = vrot.lane.b32.xlu0 %v235, 32
      %v538 = vpop.permute.xlu0 %537
      %539 = vrot.lane.b32.xlu0 %v236, 32
      %v540 = vpop.permute.xlu0 %539
      %541 = vrot.lane.b32.xlu0 %v237, 32
      %v542 = vpop.permute.xlu0 %541
      %543 = vrot.lane.b32.xlu0 %v238, 32
      %v544 = vpop.permute.xlu0 %543
      %545 = vrot.lane.b32.xlu0 %v239, 32
      %v546 = vpop.permute.xlu0 %545
      %547 = vrot.lane.b32.xlu0 %v240, 32
      %v548 = vpop.permute.xlu0 %547
      %549 = vrot.lane.b32.xlu0 %v241, 32
      %v550 = vpop.permute.xlu0 %549
      %551 = vrot.lane.b32.xlu0 %v242, 32
      %v552 = vpop.permute.xlu0 %551
      %589 = vrot.lane.b32.xlu0 %v243, 40
      %v590 = vpop.permute.xlu0 %589
      %591 = vrot.lane.b32.xlu0 %v244, 40
      %v592 = vpop.permute.xlu0 %591
      %593 = vrot.lane.b32.xlu0 %v245, 40
      %v594 = vpop.permute.xlu0 %593
      %595 = vrot.lane.b32.xlu0 %v246, 40
      %v596 = vpop.permute.xlu0 %595
      %597 = vrot.lane.b32.xlu0 %v247, 40
      %v598 = vpop.permute.xlu0 %597
      %599 = vrot.lane.b32.xlu0 %v248, 40
      %v600 = vpop.permute.xlu0 %599
      %601 = vrot.lane.b32.xlu0 %v249, 40
      %v602 = vpop.permute.xlu0 %601
      %603 = vrot.lane.b32.xlu0 %v250, 40
      %v604 = vpop.permute.xlu0 %603
      %605 = vrot.lane.b32.xlu0 %v251, 40
      %v606 = vpop.permute.xlu0 %605
      %607 = vrot.lane.b32.xlu0 %v252, 40
      %v608 = vpop.permute.xlu0 %607
      %609 = vrot.lane.b32.xlu0 %v253, 40
      %v610 = vpop.permute.xlu0 %609
      %611 = vrot.lane.b32.xlu0 %v254, 40
      %v612 = vpop.permute.xlu0 %611
      %613 = vrot.lane.b32.xlu0 %v255, 40
      %v614 = vpop.permute.xlu0 %613
      %615 = vrot.lane.b32.xlu0 %v256, 40
      %v616 = vpop.permute.xlu0 %615
      %617 = vrot.lane.b32.xlu0 %v257, 40
      %v618 = vpop.permute.xlu0 %617
      %619 = vrot.lane.b32.xlu0 %v258, 40
      %v620 = vpop.permute.xlu0 %619
      %621 = vrot.lane.b32.xlu0 %v259, 40
      %v622 = vpop.permute.xlu0 %621
      %623 = vrot.lane.b32.xlu0 %v260, 40
      %v624 = vpop.permute.xlu0 %623
      %645 = vrot.lane.b32.xlu0 %v245, 48
      %v646 = vpop.permute.xlu0 %645
      %647 = vrot.lane.b32.xlu0 %v246, 48
      %v648 = vpop.permute.xlu0 %647
      %649 = vrot.lane.b32.xlu0 %v247, 48
      %v650 = vpop.permute.xlu0 %649
      %651 = vrot.lane.b32.xlu0 %v248, 48
      %v652 = vpop.permute.xlu0 %651
      %653 = vrot.lane.b32.xlu0 %v249, 48
      %v654 = vpop.permute.xlu0 %653
      %655 = vrot.lane.b32.xlu0 %v250, 48
      %v656 = vpop.permute.xlu0 %655
      %657 = vrot.lane.b32.xlu0 %v251, 48
      %v658 = vpop.permute.xlu0 %657
      %659 = vrot.lane.b32.xlu0 %v252, 48
      %v660 = vpop.permute.xlu0 %659
      %661 = vrot.lane.b32.xlu0 %v253, 48
      %v662 = vpop.permute.xlu0 %661
      %663 = vrot.lane.b32.xlu0 %v254, 48
      %v664 = vpop.permute.xlu0 %663
      %665 = vrot.lane.b32.xlu0 %v255, 48
      %v666 = vpop.permute.xlu0 %665
      %667 = vrot.lane.b32.xlu0 %v256, 48
      %v668 = vpop.permute.xlu0 %667
      %669 = vrot.lane.b32.xlu0 %v257, 48
      %v670 = vpop.permute.xlu0 %669
      %671 = vrot.lane.b32.xlu0 %v258, 48
      %v672 = vpop.permute.xlu0 %671
      %673 = vrot.lane.b32.xlu0 %v259, 48
      %v674 = vpop.permute.xlu0 %673
      %675 = vrot.lane.b32.xlu0 %v260, 48
      %v676 = vpop.permute.xlu0 %675
      %677 = vrot.lane.b32.xlu0 %v261, 48
      %v678 = vpop.permute.xlu0 %677
      %679 = vrot.lane.b32.xlu0 %v262, 48
      %v680 = vpop.permute.xlu0 %679
      %717 = vrot.lane.b32.xlu0 %v263, 56
      %v718 = vpop.permute.xlu0 %717
      %719 = vrot.lane.b32.xlu0 %v264, 56
      %v720 = vpop.permute.xlu0 %719
      %721 = vrot.lane.b32.xlu0 %v265, 56
      %v722 = vpop.permute.xlu0 %721
      %723 = vrot.lane.b32.xlu0 %v266, 56
      %v724 = vpop.permute.xlu0 %723
      %725 = vrot.lane.b32.xlu0 %v267, 56
      %v726 = vpop.permute.xlu0 %725
      %727 = vrot.lane.b32.xlu0 %v268, 56
      %v728 = vpop.permute.xlu0 %727
      %729 = vrot.lane.b32.xlu0 %v269, 56
      %v730 = vpop.permute.xlu0 %729
      %731 = vrot.lane.b32.xlu0 %v270, 56
      %v732 = vpop.permute.xlu0 %731
      %733 = vrot.lane.b32.xlu0 %v271, 56
      %v734 = vpop.permute.xlu0 %733
      %735 = vrot.lane.b32.xlu0 %v272, 56
      %v736 = vpop.permute.xlu0 %735
      %737 = vrot.lane.b32.xlu0 %v273, 56
      %v738 = vpop.permute.xlu0 %737
      %739 = vrot.lane.b32.xlu0 %v274, 56
      %v740 = vpop.permute.xlu0 %739
      %741 = vrot.lane.b32.xlu0 %v275, 56
      %v742 = vpop.permute.xlu0 %741
      %743 = vrot.lane.b32.xlu0 %v276, 56
      %v744 = vpop.permute.xlu0 %743
      %745 = vrot.lane.b32.xlu0 %v277, 56
      %v746 = vpop.permute.xlu0 %745
      %747 = vrot.lane.b32.xlu0 %v278, 56
      %v748 = vpop.permute.xlu0 %747
      %749 = vrot.lane.b32.xlu0 %v279, 56
      %v750 = vpop.permute.xlu0 %749
      %751 = vrot.lane.b32.xlu0 %v280, 56
      %v752 = vpop.permute.xlu0 %751
      %789 = vrot.lane.b32.xlu0 %v281, 64
      %v790 = vpop.permute.xlu0 %789
      %791 = vrot.lane.b32.xlu0 %v282, 64
      %v792 = vpop.permute.xlu0 %791
      %793 = vrot.lane.b32.xlu0 %v283, 64
      %v794 = vpop.permute.xlu0 %793
      %795 = vrot.lane.b32.xlu0 %v284, 64
      %v796 = vpop.permute.xlu0 %795
      %797 = vrot.lane.b32.xlu0 %v285, 64
      %v798 = vpop.permute.xlu0 %797
      %799 = vrot.lane.b32.xlu0 %v286, 64
      %v800 = vpop.permute.xlu0 %799
      %801 = vrot.lane.b32.xlu0 %v287, 64
      %v802 = vpop.permute.xlu0 %801
      %803 = vrot.lane.b32.xlu0 %v288, 64
      %v804 = vpop.permute.xlu0 %803
      %805 = vrot.lane.b32.xlu0 %v289, 64
      %v806 = vpop.permute.xlu0 %805
      %807 = vrot.lane.b32.xlu0 %v290, 64
      %v808 = vpop.permute.xlu0 %807
      %809 = vrot.lane.b32.xlu0 %v291, 64
      %v810 = vpop.permute.xlu0 %809
      %811 = vrot.lane.b32.xlu0 %v292, 64
      %v812 = vpop.permute.xlu0 %811
      %813 = vrot.lane.b32.xlu0 %v293, 64
      %v814 = vpop.permute.xlu0 %813
      %815 = vrot.lane.b32.xlu0 %v294, 64
      %v816 = vpop.permute.xlu0 %815
      %817 = vrot.lane.b32.xlu0 %v295, 64
      %v818 = vpop.permute.xlu0 %817
      %819 = vrot.lane.b32.xlu0 %v296, 64
      %v820 = vpop.permute.xlu0 %819
      %821 = vrot.lane.b32.xlu0 %v297, 64
      %v822 = vpop.permute.xlu0 %821
      %823 = vrot.lane.b32.xlu0 %v298, 64
      %v824 = vpop.permute.xlu0 %823
      %vm843 = vcmask 64512
      %v844 = vsel %vm843, %v169, %v318
      %v845 = vsel %vm843, %v170, %v320
      %v846 = vsel %vm843, %v171, %v322
      %v847 = vsel %vm843, %v172, %v324
      %v848 = vsel %vm843, %v173, %v326
      %v849 = vsel %vm843, %v174, %v328
      %v850 = vsel %vm843, %v175, %v330
      %v851 = vsel %vm843, %v176, %v332
      %v852 = vsel %vm843, %v177, %v334
      %v853 = vsel %vm843, %v178, %v336
      %v854 = vsel %vm843, %v179, %v338
      %v855 = vsel %vm843, %v180, %v340
      %v856 = vsel %vm843, %v181, %v342
      %v857 = vsel %vm843, %v182, %v344
      %v858 = vsel %vm843, %v183, %v346
      %v859 = vsel %vm843, %v184, %v348
      %v860 = vsel %vm843, %v185, %v350
      %v861 = vsel %vm843, %v186, %v352
      %vm862 = vcmask 130048
      %v863 = vsel %vm862, %v844, %v390
      %v864 = vsel %vm862, %v845, %v392
      %v865 = vsel %vm862, %v846, %v394
      %v866 = vsel %vm862, %v847, %v396
      %v867 = vsel %vm862, %v848, %v398
      %v868 = vsel %vm862, %v849, %v400
      %v869 = vsel %vm862, %v850, %v402
      %v870 = vsel %vm862, %v851, %v404
      %v871 = vsel %vm862, %v852, %v406
      %v872 = vsel %vm862, %v853, %v408
      %v873 = vsel %vm862, %v854, %v410
      %v874 = vsel %vm862, %v855, %v412
      %v875 = vsel %vm862, %v856, %v414
      %v876 = vsel %vm862, %v857, %v416
      %v877 = vsel %vm862, %v858, %v418
      %v878 = vsel %vm862, %v859, %v420
      %v879 = vsel %vm862, %v860, %v422
      %v880 = vsel %vm862, %v861, %v424
      %vm881 = vcmask 195584
      %v882 = vsel %vm881, %v863, %v446
      %v883 = vsel %vm881, %v864, %v448
      %v884 = vsel %vm881, %v865, %v450
      %v885 = vsel %vm881, %v866, %v452
      %v886 = vsel %vm881, %v867, %v454
      %v887 = vsel %vm881, %v868, %v456
      %v888 = vsel %vm881, %v869, %v458
      %v889 = vsel %vm881, %v870, %v460
      %v890 = vsel %vm881, %v871, %v462
      %v891 = vsel %vm881, %v872, %v464
      %v892 = vsel %vm881, %v873, %v466
      %v893 = vsel %vm881, %v874, %v468
      %v894 = vsel %vm881, %v875, %v470
      %v895 = vsel %vm881, %v876, %v472
      %v896 = vsel %vm881, %v877, %v474
      %v897 = vsel %vm881, %v878, %v476
      %v898 = vsel %vm881, %v879, %v478
      %v899 = vsel %vm881, %v880, %v480
      %vm900 = vcmask 261120
      %v901 = vsel %vm900, %v882, %v518
      %v902 = vsel %vm900, %v883, %v520
      %v903 = vsel %vm900, %v884, %v522
      %v904 = vsel %vm900, %v885, %v524
      %v905 = vsel %vm900, %v886, %v526
      %v906 = vsel %vm900, %v887, %v528
      %v907 = vsel %vm900, %v888, %v530
      %v908 = vsel %vm900, %v889, %v532
      %v909 = vsel %vm900, %v890, %v534
      %v910 = vsel %vm900, %v891, %v536
      %v911 = vsel %vm900, %v892, %v538
      %v912 = vsel %vm900, %v893, %v540
      %v913 = vsel %vm900, %v894, %v542
      %v914 = vsel %vm900, %v895, %v544
      %v915 = vsel %vm900, %v896, %v546
      %v916 = vsel %vm900, %v897, %v548
      %v917 = vsel %vm900, %v898, %v550
      %v918 = vsel %vm900, %v899, %v552
      %vm919 = vcmask 326656
      %v920 = vsel %vm919, %v901, %v590
      %v921 = vsel %vm919, %v902, %v592
      %v922 = vsel %vm919, %v903, %v594
      %v923 = vsel %vm919, %v904, %v596
      %v924 = vsel %vm919, %v905, %v598
      %v925 = vsel %vm919, %v906, %v600
      %v926 = vsel %vm919, %v907, %v602
      %v927 = vsel %vm919, %v908, %v604
      %v928 = vsel %vm919, %v909, %v606
      %v929 = vsel %vm919, %v910, %v608
      %v930 = vsel %vm919, %v911, %v610
      %v931 = vsel %vm919, %v912, %v612
      %v932 = vsel %vm919, %v913, %v614
      %v933 = vsel %vm919, %v914, %v616
      %v934 = vsel %vm919, %v915, %v618
      %v935 = vsel %vm919, %v916, %v620
      %v936 = vsel %vm919, %v917, %v622
      %v937 = vsel %vm919, %v918, %v624
      %vm938 = vcmask 392192
      %v939 = vsel %vm938, %v920, %v646
      %v940 = vsel %vm938, %v921, %v648
      %v941 = vsel %vm938, %v922, %v650
      %v942 = vsel %vm938, %v923, %v652
      %v943 = vsel %vm938, %v924, %v654
      %v944 = vsel %vm938, %v925, %v656
      %v945 = vsel %vm938, %v926, %v658
      %v946 = vsel %vm938, %v927, %v660
      %v947 = vsel %vm938, %v928, %v662
      %v948 = vsel %vm938, %v929, %v664
      %v949 = vsel %vm938, %v930, %v666
      %v950 = vsel %vm938, %v931, %v668
      %v951 = vsel %vm938, %v932, %v670
      %v952 = vsel %vm938, %v933, %v672
      %v953 = vsel %vm938, %v934, %v674
      %v954 = vsel %vm938, %v935, %v676
      %v955 = vsel %vm938, %v936, %v678
      %v956 = vsel %vm938, %v937, %v680
      %vm957 = vcmask 457728
      %v958 = vsel %vm957, %v939, %v718
      %v959 = vsel %vm957, %v940, %v720
      %v960 = vsel %vm957, %v941, %v722
      %v961 = vsel %vm957, %v942, %v724
      %v962 = vsel %vm957, %v943, %v726
      %v963 = vsel %vm957, %v944, %v728
      %v964 = vsel %vm957, %v945, %v730
      %v965 = vsel %vm957, %v946, %v732
      %v966 = vsel %vm957, %v947, %v734
      %v967 = vsel %vm957, %v948, %v736
      %v968 = vsel %vm957, %v949, %v738
      %v969 = vsel %vm957, %v950, %v740
      %v970 = vsel %vm957, %v951, %v742
      %v971 = vsel %vm957, %v952, %v744
      %v972 = vsel %vm957, %v953, %v746
      %v973 = vsel %vm957, %v954, %v748
      %v974 = vsel %vm957, %v955, %v750
      %v975 = vsel %vm957, %v956, %v752
      %vm976 = vcmask 523264
      %v977 = vsel %vm976, %v958, %v790
      %v978 = vsel %vm976, %v959, %v792
      %v979 = vsel %vm976, %v960, %v794
      %v980 = vsel %vm976, %v961, %v796
      %v981 = vsel %vm976, %v962, %v798
      %v982 = vsel %vm976, %v963, %v800
      %v983 = vsel %vm976, %v964, %v802
      %v984 = vsel %vm976, %v965, %v804
      %v985 = vsel %vm976, %v966, %v806
      %v986 = vsel %vm976, %v967, %v808
      %v987 = vsel %vm976, %v968, %v810
      %v988 = vsel %vm976, %v969, %v812
      %v989 = vsel %vm976, %v970, %v814
      %v990 = vsel %vm976, %v971, %v816
      %v991 = vsel %vm976, %v972, %v818
      %v992 = vsel %vm976, %v973, %v820
      %v993 = vsel %vm976, %v974, %v822
      %v994 = vsel %vm976, %v975, %v824
      %v995 = vld [vmem:[%s1] sm:$0xff]
      %v996 = vld [vmem:[%s1 + $0x8] sm:$0xff]
      %v997 = vld [vmem:[%s1 + $0x10] sm:$0xff]
      %v998 = vld [vmem:[%s1 + $0x18] sm:$0xff]
      %v999 = vld [vmem:[%s1 + $0x20] sm:$0xff]
      %v1000 = vld [vmem:[%s1 + $0x28] sm:$0xff]
      %v1001 = vld [vmem:[%s1 + $0x30] sm:$0xff]
      %v1002 = vld [vmem:[%s1 + $0x38] sm:$0xff]
      %v1003 = vld [vmem:[%s1 + $0x40] sm:$0xff]
      %vm1004 = vcmask 588800
      %v1006 = vsel %vm1004, %v977, 0
      %v1009 = vsel %vm1004, %v978, 0
      %v1012 = vsel %vm1004, %v979, 0
      %v1015 = vsel %vm1004, %v980, 0
      %v1018 = vsel %vm1004, %v981, 0
      %v1021 = vsel %vm1004, %v982, 0
      %v1024 = vsel %vm1004, %v983, 0
      %v1027 = vsel %vm1004, %v984, 0
      %v1030 = vsel %vm1004, %v985, 0
      %v1033 = vsel %vm1004, %v986, 0
      %v1036 = vsel %vm1004, %v987, 0
      %v1039 = vsel %vm1004, %v988, 0
      %v1042 = vsel %vm1004, %v989, 0
      %v1045 = vsel %vm1004, %v990, 0
      %v1048 = vsel %vm1004, %v991, 0
      %v1051 = vsel %vm1004, %v992, 0
      %v1054 = vsel %vm1004, %v993, 0
      %v1057 = vsel %vm1004, %v994, 0
      %1059 = vmatpush.msra.mxu0 0.0
      %1060 = vmatpush.msra.mxu0 0.0
      %1061 = vmatpush.msra.mxu0 0.0
      %1062 = vmatpush.msra.mxu0 0.0
      %1063 = vmatpush.msra.mxu0 0.0
      %1064 = vmatpush.msra.mxu0 0.0
      %1065 = vmatpush.msra.mxu0 0.0
      %1066 = vmatpush.msra.mxu0 %v1003
      %1067 = vmatpush.msra.mxu0 %v1002
      %1068 = vmatpush.msra.mxu0 %v1001
      %1069 = vmatpush.msra.mxu0 %v1000
      %1070 = vmatpush.msra.mxu0 %v999
      %1071 = vmatpush.msra.mxu0 %v998
      %1072 = vmatpush.msra.mxu0 %v997
      %1073 = vmatpush.msra.mxu0 %v996
      %1074 = vmatpush.msra.mxu0 %v995
      %1075 = vmatmul.f32.gmra.mxu0 %v1006
      %v1076 = vpop.f32.mrf.mxu0
      %v1077 = vadd.f32 0.0, %v1076
      %1078 = vmatmul.f32.gmra.mxu0 %v1009
      %v1079 = vpop.f32.mrf.mxu0
      %v1080 = vadd.f32 0.0, %v1079
      %1081 = vmatmul.f32.gmra.mxu0 %v1012
      %v1082 = vpop.f32.mrf.mxu0
      %v1083 = vadd.f32 0.0, %v1082
      %1084 = vmatmul.f32.gmra.mxu0 %v1015
      %v1085 = vpop.f32.mrf.mxu0
      %v1086 = vadd.f32 0.0, %v1085
      %1087 = vmatmul.f32.gmra.mxu0 %v1018
      %v1088 = vpop.f32.mrf.mxu0
      %v1089 = vadd.f32 0.0, %v1088
      %1090 = vmatmul.f32.gmra.mxu0 %v1021
      %v1091 = vpop.f32.mrf.mxu0
      %v1092 = vadd.f32 0.0, %v1091
      %1093 = vmatmul.f32.gmra.mxu0 %v1024
      %v1094 = vpop.f32.mrf.mxu0
      %v1095 = vadd.f32 0.0, %v1094
      %1096 = vmatmul.f32.gmra.mxu0 %v1027
      %v1097 = vpop.f32.mrf.mxu0
      %v1098 = vadd.f32 0.0, %v1097
      %1099 = vmatmul.f32.gmra.mxu0 %v1030
      %v1100 = vpop.f32.mrf.mxu0
      %v1101 = vadd.f32 0.0, %v1100
      %1102 = vmatmul.f32.gmra.mxu0 %v1033
      %v1103 = vpop.f32.mrf.mxu0
      %v1104 = vadd.f32 0.0, %v1103
      %1105 = vmatmul.f32.gmra.mxu0 %v1036
      %v1106 = vpop.f32.mrf.mxu0
      %v1107 = vadd.f32 0.0, %v1106
      %1108 = vmatmul.f32.gmra.mxu0 %v1039
      %v1109 = vpop.f32.mrf.mxu0
      %v1110 = vadd.f32 0.0, %v1109
      %1111 = vmatmul.f32.gmra.mxu0 %v1042
      %v1112 = vpop.f32.mrf.mxu0
      %v1113 = vadd.f32 0.0, %v1112
      %1114 = vmatmul.f32.gmra.mxu0 %v1045
      %v1115 = vpop.f32.mrf.mxu0
      %v1116 = vadd.f32 0.0, %v1115
      %1117 = vmatmul.f32.gmra.mxu0 %v1048
      %v1118 = vpop.f32.mrf.mxu0
      %v1119 = vadd.f32 0.0, %v1118
      %1120 = vmatmul.f32.gmra.mxu0 %v1051
      %v1121 = vpop.f32.mrf.mxu0
      %v1122 = vadd.f32 0.0, %v1121
      %1123 = vmatmul.f32.gmra.mxu0 %v1054
      %v1124 = vpop.f32.mrf.mxu0
      %v1125 = vadd.f32 0.0, %v1124
      %1126 = vmatmul.f32.gmra.mxu0 %v1057
      %v1127 = vpop.f32.mrf.mxu0
      %v1128 = vadd.f32 0.0, %v1127
      %1129 = vdwg.mxu0
      %v1130 = vld [vmem:[%s2] sm:$0xff]
      %v1131 = vld [vmem:[%s2 + $0x8] sm:$0xff]
      %v1132 = vld [vmem:[%s2 + $0x10] sm:$0xff]
      %v1133 = vld [vmem:[%s2 + $0x18] sm:$0xff]
      %v1134 = vld [vmem:[%s2 + $0x20] sm:$0xff]
      %v1135 = vld [vmem:[%s2 + $0x28] sm:$0xff]
      %v1136 = vld [vmem:[%s2 + $0x30] sm:$0xff]
      %v1137 = vld [vmem:[%s2 + $0x38] sm:$0xff]
      %v1138 = vld [vmem:[%s2 + $0x40] sm:$0xff]
      %v1139 = vld [vmem:[%s2 + $0x48] sm:$0xff]
      %v1140 = vld [vmem:[%s2 + $0x50] sm:$0xff]
      %v1141 = vld [vmem:[%s2 + $0x58] sm:$0xff]
      %v1142 = vld [vmem:[%s2 + $0x60] sm:$0xff]
      %v1143 = vld [vmem:[%s2 + $0x68] sm:$0xff]
      %v1144 = vld [vmem:[%s2 + $0x70] sm:$0xff]
      %v1145 = vld [vmem:[%s2 + $0x78] sm:$0xff]
      %v1146 = vld [vmem:[%s2 + $0x80] sm:$0xff]
      %v1147 = vld [vmem:[%s2 + $0x88] sm:$0xff]
      %1149 = vset.pattern.permute.xlu0 0
      %1150 = vperm.xlu0 %1149, %v1130
      %v1151 = vpop.permute.xlu0 %1150
      %1154 = vset.pattern.permute.xlu0 0
      %1155 = vperm.xlu0 %1154, %v1131
      %v1156 = vpop.permute.xlu0 %1155
      %1159 = vset.pattern.permute.xlu0 0
      %1160 = vperm.xlu0 %1159, %v1132
      %v1161 = vpop.permute.xlu0 %1160
      %1164 = vset.pattern.permute.xlu0 0
      %1165 = vperm.xlu0 %1164, %v1133
      %v1166 = vpop.permute.xlu0 %1165
      %1169 = vset.pattern.permute.xlu0 0
      %1170 = vperm.xlu0 %1169, %v1134
      %v1171 = vpop.permute.xlu0 %1170
      %1174 = vset.pattern.permute.xlu0 0
      %1175 = vperm.xlu0 %1174, %v1135
      %v1176 = vpop.permute.xlu0 %1175
      %1179 = vset.pattern.permute.xlu0 0
      %1180 = vperm.xlu0 %1179, %v1136
      %v1181 = vpop.permute.xlu0 %1180
      %1184 = vset.pattern.permute.xlu0 0
      %1185 = vperm.xlu0 %1184, %v1137
      %v1186 = vpop.permute.xlu0 %1185
      %1189 = vset.pattern.permute.xlu0 0
      %1190 = vperm.xlu0 %1189, %v1138
      %v1191 = vpop.permute.xlu0 %1190
      %1194 = vset.pattern.permute.xlu0 0
      %1195 = vperm.xlu0 %1194, %v1139
      %v1196 = vpop.permute.xlu0 %1195
      %1199 = vset.pattern.permute.xlu0 0
      %1200 = vperm.xlu0 %1199, %v1140
      %v1201 = vpop.permute.xlu0 %1200
      %1204 = vset.pattern.permute.xlu0 0
      %1205 = vperm.xlu0 %1204, %v1141
      %v1206 = vpop.permute.xlu0 %1205
      %1209 = vset.pattern.permute.xlu0 0
      %1210 = vperm.xlu0 %1209, %v1142
      %v1211 = vpop.permute.xlu0 %1210
      %1214 = vset.pattern.permute.xlu0 0
      %1215 = vperm.xlu0 %1214, %v1143
      %v1216 = vpop.permute.xlu0 %1215
      %1219 = vset.pattern.permute.xlu0 0
      %1220 = vperm.xlu0 %1219, %v1144
      %v1221 = vpop.permute.xlu0 %1220
      %1224 = vset.pattern.permute.xlu0 0
      %1225 = vperm.xlu0 %1224, %v1145
      %v1226 = vpop.permute.xlu0 %1225
      %1229 = vset.pattern.permute.xlu0 0
      %1230 = vperm.xlu0 %1229, %v1146
      %v1231 = vpop.permute.xlu0 %1230
      %1234 = vset.pattern.permute.xlu0 0
      %1235 = vperm.xlu0 %1234, %v1147
      %v1236 = vpop.permute.xlu0 %1235
      %v1238 = vmul.f32 %v1077, %v1151
      %v1239 = vmul.f32 %v1080, %v1156
      %v1240 = vmul.f32 %v1083, %v1161
      %v1241 = vmul.f32 %v1086, %v1166
      %v1242 = vmul.f32 %v1089, %v1171
      %v1243 = vmul.f32 %v1092, %v1176
      %v1244 = vmul.f32 %v1095, %v1181
      %v1245 = vmul.f32 %v1098, %v1186
      %v1246 = vmul.f32 %v1101, %v1191
      %v1247 = vmul.f32 %v1104, %v1196
      %v1248 = vmul.f32 %v1107, %v1201
      %v1249 = vmul.f32 %v1110, %v1206
      %v1250 = vmul.f32 %v1113, %v1211
      %v1251 = vmul.f32 %v1116, %v1216
      %v1252 = vmul.f32 %v1119, %v1221
      %v1253 = vmul.f32 %v1122, %v1226
      %v1254 = vmul.f32 %v1125, %v1231
      %v1255 = vmul.f32 %v1128, %v1236
      %v1256 = vadd.f32 %v1238, %v1239
      %v1257 = vadd.f32 %v1256, %v1240
      %v1258 = vadd.f32 %v1257, %v1241
      %v1259 = vadd.f32 %v1258, %v1242
      %v1260 = vadd.f32 %v1259, %v1243
      %v1261 = vadd.f32 %v1260, %v1244
      %v1262 = vadd.f32 %v1261, %v1245
      %v1263 = vadd.f32 %v1262, %v1246
      %v1264 = vadd.f32 %v1263, %v1247
      %v1265 = vadd.f32 %v1264, %v1248
      %v1266 = vadd.f32 %v1265, %v1249
      %v1267 = vadd.f32 %v1266, %v1250
      %v1268 = vadd.f32 %v1267, %v1251
      %v1269 = vadd.f32 %v1268, %v1252
      %v1270 = vadd.f32 %v1269, %v1253
      %v1271 = vadd.f32 %v1270, %v1254
      %v1272 = vadd.f32 %v1271, %v1255
      %v1273 = vrot.slane %v1272, 4
      %v1274 = vadd.f32 %v1272, %v1273
      %v1275 = vrot.slane %v1274, 2
      %v1276 = vadd.f32 %v1274, %v1275
      %v1277 = vrot.slane %v1276, 1
      %v1278 = vadd.f32 %v1276, %v1277
      %v1279 = vmul.f32 %v1238, %v1077
      %v1280 = vmul.f32 %v1239, %v1080
      %v1281 = vmul.f32 %v1240, %v1083
      %v1282 = vmul.f32 %v1241, %v1086
      %v1283 = vmul.f32 %v1242, %v1089
      %v1284 = vmul.f32 %v1243, %v1092
      %v1285 = vmul.f32 %v1244, %v1095
      %v1286 = vmul.f32 %v1245, %v1098
      %v1287 = vmul.f32 %v1246, %v1101
      %v1288 = vmul.f32 %v1247, %v1104
      %v1289 = vmul.f32 %v1248, %v1107
      %v1290 = vmul.f32 %v1249, %v1110
      %v1291 = vmul.f32 %v1250, %v1113
      %v1292 = vmul.f32 %v1251, %v1116
      %v1293 = vmul.f32 %v1252, %v1119
      %v1294 = vmul.f32 %v1253, %v1122
      %v1295 = vmul.f32 %v1254, %v1125
      %v1296 = vmul.f32 %v1255, %v1128
      %v1297 = vadd.f32 %v1279, %v1280
      %v1298 = vadd.f32 %v1297, %v1281
      %v1299 = vadd.f32 %v1298, %v1282
      %v1300 = vadd.f32 %v1299, %v1283
      %v1301 = vadd.f32 %v1300, %v1284
      %v1302 = vadd.f32 %v1301, %v1285
      %v1303 = vadd.f32 %v1302, %v1286
      %v1304 = vadd.f32 %v1303, %v1287
      %v1305 = vadd.f32 %v1304, %v1288
      %v1306 = vadd.f32 %v1305, %v1289
      %v1307 = vadd.f32 %v1306, %v1290
      %v1308 = vadd.f32 %v1307, %v1291
      %v1309 = vadd.f32 %v1308, %v1292
      %v1310 = vadd.f32 %v1309, %v1293
      %v1311 = vadd.f32 %v1310, %v1294
      %v1312 = vadd.f32 %v1311, %v1295
      %v1313 = vadd.f32 %v1312, %v1296
      %v1314 = vrot.slane %v1313, 4
      %v1315 = vadd.f32 %v1313, %v1314
      %v1316 = vrot.slane %v1315, 2
      %v1317 = vadd.f32 %v1315, %v1316
      %v1318 = vrot.slane %v1317, 1
      %v1319 = vadd.f32 %v1317, %v1318
      %vm1320 = vcmask 1040384
      %v1321 = vsel %vm1320, %v1278, %v1319
      %1322 = vst [vmem:[%s168] sm:$0x3] %v1321
      %p1323 = scmp.lt.s32.totalorder %s14, 3
      %s1324 = scalar_select %p1323, %s14, 3
      %s1325 = smul.addr %s1324, 2
      %s1326 = scalar_lea.vmem %s3, %s1325
      // Predicated region
      $region33: #{conv_block_forward.2} parent=31 // pred_check
        %p1327 = pneg %p100
      $region34: #{conv_block_forward.2} parent=31 // pred_check_branch
        %1329 = sbr.rel (%p1327) target = $region36
      $region35: #{conv_block_forward.2} parent=31 // pred_region
        _
      $region36: #{conv_block_forward.2} parent=31 // pred_fallthru
        _
    $region32: #{conv_block_forward.2} parent=5 // pred_fallthru
      _
    %p1330 = scmp.le.s32.totalorder 2, %s9
    // Predicated region
    $region37: #{conv_block_forward.2} parent=5 // pred_check
      %p1331 = pneg %p1330
    $region38: #{conv_block_forward.2} parent=5 // pred_check_branch
      %1333 = sbr.rel (%p1331) target = $region40
    $region39: #{conv_block_forward.2} parent=5 // pred_region
      %s1334 = ssub.s32 %s9, 2
      // Predicated region
      $region41: #{conv_block_forward.2} parent=39 // pred_check
        %p1335 = pneg %p106
      $region42: #{conv_block_forward.2} parent=39 // pred_check_branch
        %1337 = sbr.rel (%p1335) target = $region44
      $region43: #{conv_block_forward.2} parent=39 // pred_region
        %p1338 = scmp.lt.s32.totalorder %s15, 3
        %s1339 = scalar_select %p1338, %s15, 3
        %s1340 = smul.addr %s1339, 2
        %s1341 = scalar_lea.vmem %s3, %s1340
      $region44: #{conv_block_forward.2} parent=39 // pred_fallthru
        _
    $region40: #{conv_block_forward.2} parent=5 // pred_fallthru
      _
  $region6: #{conv_block_forward.2} parent=0 // loop_footer
    %s13 = sadd.s32 1, %s9
  $region7: #{conv_block_forward.2} parent=0 // loop_footer_branch
    %8 = sbr.rel target = $region3
  $region8: #{conv_block_forward.2} parent=0 // loop_exit
    _

</llo_original>
